<compile_context>
chip_gen: v5e
topology: v5e:2x2
jax: 0.10.0
libtpu: 0.0.40
codegen_flags: <defaults>
</compile_context>

<pallas_src>
from functools import partial

import jax
import jax.numpy as jnp
from jax.experimental import pallas as pl
from jax.experimental.pallas import tpu as pltpu


def _conv3x3_bias_relu_planar(x, w_ref, b_col, hrow, wrow, H, W):
    """3x3 'same' conv + bias + ReLU on a planar, lane-dense (Cin, H*W) slab.

    x:     (Cin, H*W)      compute dtype
    w_ref: (9, Cout, Cin)  ref; tap-major (t = kh*3 + kw), pre-transposed
    b_col: (Cout, 1)       float32
    hrow:  (1, H*W) int32  h coordinate of each flattened spatial position
    wrow:  (1, H*W) int32  w coordinate of each flattened spatial position
    returns (Cout, H*W)    float32
    """
    HW = x.shape[1]
    zero = jnp.zeros((), x.dtype)
    # Edge-validity masks for the 'same' zero padding (hoisted out of the loop).
    h_ok = [hrow > 0, None, hrow < H - 1]   # kh = 0, 1, 2
    w_ok = [wrow > 0, None, wrow < W - 1]   # kw = 0, 1, 2

    acc = None
    for kh in range(3):
        for kw in range(3):
            d = (kh - 1) * W + (kw - 1)          # tap[s] = x[:, s + d]
            if d == 0:
                tap = x                          # center tap: no roll, no mask
            else:
                tap = pltpu.roll(x, shift=(-d) % HW, axis=1)   # XLU lane roll
            mask = h_ok[kh]
            if w_ok[kw] is not None:
                mask = w_ok[kw] if mask is None else (mask & w_ok[kw])
            if mask is not None:
                tap = jnp.where(mask, tap, zero)               # zero-padding
            p = jnp.dot(w_ref[kh * 3 + kw], tap,               # (Cout, H*W)
                        preferred_element_type=jnp.float32)
            acc = p if acc is None else acc + p
    return jnp.maximum(acc + b_col, 0.0)                       # bias + ReLU


def fused_conv2d_block_kernel(x_ref, w1_ref, b1_ref, w2_ref, b2_ref,
                              hrow_ref, wrow_ref, o_ref, *, H, W):
    # x_ref : (1, Cin,  H*W)  planar NCHW slab of one image (lane-dense)
    # w1_ref: (9, Cout, Cin)   b1_ref: (Cout, 1)
    # w2_ref: (9, Cout, Cout)  b2_ref: (Cout, 1)
    # o_ref : (1, Cout, H*W)  planar NCHW output slab
    cdt = x_ref.dtype
    hrow = hrow_ref[...]
    wrow = wrow_ref[...]
    x = x_ref[0]                                               # (Cin, H*W)

    # Layer 1 -> intermediate stays in VMEM/vregs (no HBM round trip).
    h1 = _conv3x3_bias_relu_planar(x, w1_ref, b1_ref[...].astype(jnp.float32),
                                   hrow, wrow, H, W)           # (Cout, H*W) f32
    h1 = h1.astype(cdt)                                        # single cast
    # Layer 2, fused.
    y = _conv3x3_bias_relu_planar(h1, w2_ref, b2_ref[...].astype(jnp.float32),
                                  hrow, wrow, H, W)            # (Cout, H*W) f32

    o_ref[0] = y.astype(o_ref.dtype)                           # lane-dense vst


def conv2d_block_forward(x_nchw, params, compute_dtype=jnp.float32):
    """PyTorch Conv2dBlock.forward (norm_layer=None): relu(conv2(relu(conv1(x))))."""
    N, Cin, H, W = x_nchw.shape
    Cout = params["w1"].shape[-1]
    HW = H * W

    # Planar NCHW with H,W flattened -- a free reshape, NO transpose.
    x = x_nchw.reshape(N, Cin, HW).astype(compute_dtype)
    # Per-tap transposed weights: w[t] = W[kh, kw].T  (t = kh*3 + kw).
    w1 = jnp.transpose(params["w1"].reshape(9, Cin, Cout), (0, 2, 1)).astype(compute_dtype)
    w2 = jnp.transpose(params["w2"].reshape(9, Cout, Cout), (0, 2, 1)).astype(compute_dtype)
    b1 = params["b1"].reshape(Cout, 1).astype(jnp.float32)
    b2 = params["b2"].reshape(Cout, 1).astype(jnp.float32)
    # Spatial coordinates of each flattened position (for the padding masks).
    hrow = jnp.repeat(jnp.arange(H, dtype=jnp.int32), W).reshape(1, HW)
    wrow = jnp.tile(jnp.arange(W, dtype=jnp.int32), H).reshape(1, HW)

    itemsize = jnp.dtype(compute_dtype).itemsize
    flops = 2 * 9 * N * H * W * (Cin * Cout + Cout * Cout)
    bytes_accessed = (itemsize * (x.size + N * Cout * HW + w1.size + w2.size)
                      + 4 * (b1.size + b2.size) + 4 * (hrow.size + wrow.size))

    out = pl.pallas_call(
        partial(fused_conv2d_block_kernel, H=H, W=W),
        out_shape=jax.ShapeDtypeStruct((N, Cout, HW), compute_dtype),
        grid_spec=pltpu.PrefetchScalarGridSpec(
            num_scalar_prefetch=0,
            grid=(N,),
            in_specs=[
                pl.BlockSpec((1, Cin, HW), lambda n: (n, 0, 0)),
                pl.BlockSpec((9, Cout, Cin), lambda n: (0, 0, 0)),
                pl.BlockSpec((Cout, 1), lambda n: (0, 0)),
                pl.BlockSpec((9, Cout, Cout), lambda n: (0, 0, 0)),
                pl.BlockSpec((Cout, 1), lambda n: (0, 0)),
                pl.BlockSpec((1, HW), lambda n: (0, 0)),
                pl.BlockSpec((1, HW), lambda n: (0, 0)),
            ],
            out_specs=pl.BlockSpec((1, Cout, HW), lambda n: (n, 0, 0)),
        ),
        compiler_params=pltpu.CompilerParams(
            dimension_semantics=("parallel",),
            vmem_limit_bytes=32 * 1024 * 1024),   # explicit; well under physical on v5e/v6e/v7x
        cost_estimate=pl.CostEstimate(
            flops=flops, transcendentals=0, bytes_accessed=bytes_accessed),
    )(x, w1, b1, w2, b2, hrow, wrow)

    # Free reshape back to NCHW (no transpose anywhere in the hot path).
    return out.reshape(N, Cout, H, W).astype(x_nchw.dtype)


def init_params(key, in_channels, out_channels):
    # nn.Conv2d default init: U(-1/sqrt(fan_in), +1/sqrt(fan_in)).
    k1, k2, k3, k4 = jax.random.split(key, 4)
    lim1 = 1.0 / jnp.sqrt(in_channels * 9.0)
    lim2 = 1.0 / jnp.sqrt(out_channels * 9.0)
    # weights stored as (kh, kw, Cin, Cout) == PyTorch (Co, Ci, kh, kw) transposed
    w1 = jax.random.uniform(k1, (3, 3, in_channels, out_channels), jnp.float32, -lim1, lim1)
    b1 = jax.random.uniform(k2, (out_channels,), jnp.float32, -lim1, lim1)
    w2 = jax.random.uniform(k3, (3, 3, out_channels, out_channels), jnp.float32, -lim2, lim2)
    b2 = jax.random.uniform(k4, (out_channels,), jnp.float32, -lim2, lim2)
    return {"w1": w1, "b1": b1, "w2": w2, "b2": b2}


def reference_forward(x_nchw, params):
    # Pure-JAX reference (matches PyTorch cross-correlation conv, NCHW).
    def conv(x, w, b):
        w_oihw = jnp.transpose(w, (3, 2, 0, 1))
        y = jax.lax.conv_general_dilated(
            x, w_oihw, window_strides=(1, 1), padding="SAME",
            dimension_numbers=("NCHW", "OIHW", "NCHW"))
        return jax.nn.relu(y + b[None, :, None, None])
    x = conv(x_nchw, params["w1"], params["b1"])
    x = conv(x, params["w2"], params["b2"])
    return x


if __name__ == "__main__":
    key = jax.random.PRNGKey(0)
    kx, kp = jax.random.split(key)
    N, Cin, H, W = 2, 4, 16, 16
    Cout = 8
    x = jax.random.normal(kx, (N, Cin, H, W), jnp.float32)
    params = init_params(kp, Cin, Cout)

    ref = reference_forward(x, params)

    # f32 operand path (tight numerical check).
    out = jax.block_until_ready(conv2d_block_forward(x, params, jnp.float32))
    assert out.shape == (N, Cout, H, W)
    assert jnp.allclose(out, ref, atol=1e-4, rtol=1e-4)

    # bf16 operand path (recommended default on v6e/v7x): f32 accumulation,
    # intermediate quantized to bf16 -> loose tolerance vs the f32 reference.
    out_bf16 = jax.block_until_ready(conv2d_block_forward(x, params, jnp.bfloat16))
    assert out_bf16.shape == (N, Cout, H, W)
    assert jnp.allclose(out_bf16, ref, atol=1e-1, rtol=1e-1)

    print("KERNEL_OK")
</pallas_src>

<mosaic_0001>
module attributes {stable_mosaic.version = 11 : i64} {
  func.func @fused_conv2d_block_kernel(%arg0: i32, %arg1: memref<1x4x256xf32, #tpu.memory_space<vmem>>, %arg2: memref<9x8x4xf32, #tpu.memory_space<vmem>>, %arg3: memref<8x1xf32, #tpu.memory_space<vmem>>, %arg4: memref<9x8x8xf32, #tpu.memory_space<vmem>>, %arg5: memref<8x1xf32, #tpu.memory_space<vmem>>, %arg6: memref<1x256xi32, #tpu.memory_space<vmem>>, %arg7: memref<1x256xi32, #tpu.memory_space<vmem>>, %arg8: memref<1x8x256xf32, #tpu.memory_space<vmem>>) attributes {dimension_semantics = [#tpu.dimension_semantics<parallel>], iteration_bounds = array<i64: 2>, scalar_prefetch = 0 : i64, scratch_operands = 0 : i64, tpu.core_type = #tpu.core_type<tc>, window_params = [{transform_indices = @transform_0, window_bounds = array<i64: 1, 4, 256>}, {pipeline_mode = #tpu.pipeline_mode<synchronous>, transform_indices = @transform_1, window_bounds = array<i64: 9, 8, 4>}, {pipeline_mode = #tpu.pipeline_mode<synchronous>, transform_indices = @transform_2, window_bounds = array<i64: 8, 1>}, {pipeline_mode = #tpu.pipeline_mode<synchronous>, transform_indices = @transform_3, window_bounds = array<i64: 9, 8, 8>}, {pipeline_mode = #tpu.pipeline_mode<synchronous>, transform_indices = @transform_4, window_bounds = array<i64: 8, 1>}, {pipeline_mode = #tpu.pipeline_mode<synchronous>, transform_indices = @transform_5, window_bounds = array<i64: 1, 256>}, {pipeline_mode = #tpu.pipeline_mode<synchronous>, transform_indices = @transform_6, window_bounds = array<i64: 1, 256>}, {transform_indices = @transform_7, window_bounds = array<i64: 1, 8, 256>}]} {
    %c0 = arith.constant 0 : index
    %c0_0 = arith.constant 0 : index
    %0 = vector.load %arg6[%c0, %c0_0] : memref<1x256xi32, #tpu.memory_space<vmem>>, vector<1x256xi32>
    %c0_1 = arith.constant 0 : index
    %c0_2 = arith.constant 0 : index
    %1 = vector.load %arg7[%c0_1, %c0_2] : memref<1x256xi32, #tpu.memory_space<vmem>>, vector<1x256xi32>
    %c0_3 = arith.constant 0 : index
    %c0_4 = arith.constant 0 : index
    %c0_5 = arith.constant 0 : index
    %2 = vector.load %arg1[%c0_3, %c0_4, %c0_5] : memref<1x4x256xf32, #tpu.memory_space<vmem>>, vector<1x4x256xf32>
    %3 = vector.shape_cast %2 : vector<1x4x256xf32> to vector<4x256xf32>
    %c0_6 = arith.constant 0 : index
    %c0_7 = arith.constant 0 : index
    %4 = vector.load %arg3[%c0_6, %c0_7] : memref<8x1xf32, #tpu.memory_space<vmem>>, vector<8x1xf32>
    %c0_i32 = arith.constant 0 : i32
    %5 = vector.broadcast %c0_i32 : i32 to vector<1x256xi32>
    %6 = arith.cmpi sgt, %0, %5 : vector<1x256xi32>
    %c15_i32 = arith.constant 15 : i32
    %7 = vector.broadcast %c15_i32 : i32 to vector<1x256xi32>
    %8 = arith.cmpi slt, %0, %7 : vector<1x256xi32>
    %c0_i32_8 = arith.constant 0 : i32
    %9 = vector.broadcast %c0_i32_8 : i32 to vector<1x256xi32>
    %10 = arith.cmpi sgt, %1, %9 : vector<1x256xi32>
    %c15_i32_9 = arith.constant 15 : i32
    %11 = vector.broadcast %c15_i32_9 : i32 to vector<1x256xi32>
    %12 = arith.cmpi slt, %1, %11 : vector<1x256xi32>
    %c17_i32 = arith.constant 17 : i32
    %13 = tpu.dynamic_rotate %3 by %c17_i32 dim 1 : vector<4x256xf32>, i32 -> vector<4x256xf32>
    %14 = arith.andi %6, %10 : vector<1x256xi1>
    %cst = arith.constant 0.000000e+00 : f32
    %15 = vector.shape_cast %14 : vector<1x256xi1> to vector<1x256xi1>
    %16 = vector.broadcast %15 : vector<1x256xi1> to vector<4x256xi1>
    %17 = vector.broadcast %cst : f32 to vector<4x256xf32>
    %18 = arith.select %16, %13, %17 : vector<4x256xi1>, vector<4x256xf32>
    %c0_10 = arith.constant 0 : index
    %c0_11 = arith.constant 0 : index
    %c0_12 = arith.constant 0 : index
    %19 = vector.load %arg2[%c0_10, %c0_11, %c0_12] : memref<9x8x4xf32, #tpu.memory_space<vmem>>, vector<1x8x4xf32>
    %20 = vector.shape_cast %19 : vector<1x8x4xf32> to vector<8x4xf32>
    %cst_13 = arith.constant dense<0.000000e+00> : vector<8x256xf32>
    %21 = tpu.matmul %20, %18, %cst_13 {dimension_numbers = #tpu.dot_dimension_numbers<[1], [0], [0], [1], [0, 0, 1, 1], [], []>} : vector<8x4xf32>, vector<4x256xf32>, vector<8x256xf32> -> vector<8x256xf32>
    %c16_i32 = arith.constant 16 : i32
    %22 = tpu.dynamic_rotate %3 by %c16_i32 dim 1 : vector<4x256xf32>, i32 -> vector<4x256xf32>
    %cst_14 = arith.constant 0.000000e+00 : f32
    %23 = vector.shape_cast %6 : vector<1x256xi1> to vector<1x256xi1>
    %24 = vector.broadcast %23 : vector<1x256xi1> to vector<4x256xi1>
    %25 = vector.broadcast %cst_14 : f32 to vector<4x256xf32>
    %26 = arith.select %24, %22, %25 : vector<4x256xi1>, vector<4x256xf32>
    %c1 = arith.constant 1 : index
    %c0_15 = arith.constant 0 : index
    %c0_16 = arith.constant 0 : index
    %27 = vector.load %arg2[%c1, %c0_15, %c0_16] : memref<9x8x4xf32, #tpu.memory_space<vmem>>, vector<1x8x4xf32>
    %28 = vector.shape_cast %27 : vector<1x8x4xf32> to vector<8x4xf32>
    %cst_17 = arith.constant dense<0.000000e+00> : vector<8x256xf32>
    %29 = tpu.matmul %28, %26, %cst_17 {dimension_numbers = #tpu.dot_dimension_numbers<[1], [0], [0], [1], [0, 0, 1, 1], [], []>} : vector<8x4xf32>, vector<4x256xf32>, vector<8x256xf32> -> vector<8x256xf32>
    %30 = arith.addf %21, %29 : vector<8x256xf32>
    %c15_i32_18 = arith.constant 15 : i32
    %31 = tpu.dynamic_rotate %3 by %c15_i32_18 dim 1 : vector<4x256xf32>, i32 -> vector<4x256xf32>
    %32 = arith.andi %6, %12 : vector<1x256xi1>
    %cst_19 = arith.constant 0.000000e+00 : f32
    %33 = vector.shape_cast %32 : vector<1x256xi1> to vector<1x256xi1>
    %34 = vector.broadcast %33 : vector<1x256xi1> to vector<4x256xi1>
    %35 = vector.broadcast %cst_19 : f32 to vector<4x256xf32>
    %36 = arith.select %34, %31, %35 : vector<4x256xi1>, vector<4x256xf32>
    %c2 = arith.constant 2 : index
    %c0_20 = arith.constant 0 : index
    %c0_21 = arith.constant 0 : index
    %37 = vector.load %arg2[%c2, %c0_20, %c0_21] : memref<9x8x4xf32, #tpu.memory_space<vmem>>, vector<1x8x4xf32>
    %38 = vector.shape_cast %37 : vector<1x8x4xf32> to vector<8x4xf32>
    %cst_22 = arith.constant dense<0.000000e+00> : vector<8x256xf32>
    %39 = tpu.matmul %38, %36, %cst_22 {dimension_numbers = #tpu.dot_dimension_numbers<[1], [0], [0], [1], [0, 0, 1, 1], [], []>} : vector<8x4xf32>, vector<4x256xf32>, vector<8x256xf32> -> vector<8x256xf32>
    %40 = arith.addf %30, %39 : vector<8x256xf32>
    %c1_i32 = arith.constant 1 : i32
    %41 = tpu.dynamic_rotate %3 by %c1_i32 dim 1 : vector<4x256xf32>, i32 -> vector<4x256xf32>
    %cst_23 = arith.constant 0.000000e+00 : f32
    %42 = vector.shape_cast %10 : vector<1x256xi1> to vector<1x256xi1>
    %43 = vector.broadcast %42 : vector<1x256xi1> to vector<4x256xi1>
    %44 = vector.broadcast %cst_23 : f32 to vector<4x256xf32>
    %45 = arith.select %43, %41, %44 : vector<4x256xi1>, vector<4x256xf32>
    %c3 = arith.constant 3 : index
    %c0_24 = arith.constant 0 : index
    %c0_25 = arith.constant 0 : index
    %46 = vector.load %arg2[%c3, %c0_24, %c0_25] : memref<9x8x4xf32, #tpu.memory_space<vmem>>, vector<1x8x4xf32>
    %47 = vector.shape_cast %46 : vector<1x8x4xf32> to vector<8x4xf32>
    %cst_26 = arith.constant dense<0.000000e+00> : vector<8x256xf32>
    %48 = tpu.matmul %47, %45, %cst_26 {dimension_numbers = #tpu.dot_dimension_numbers<[1], [0], [0], [1], [0, 0, 1, 1], [], []>} : vector<8x4xf32>, vector<4x256xf32>, vector<8x256xf32> -> vector<8x256xf32>
    %49 = arith.addf %40, %48 : vector<8x256xf32>
    %c4 = arith.constant 4 : index
    %c0_27 = arith.constant 0 : index
    %c0_28 = arith.constant 0 : index
    %50 = vector.load %arg2[%c4, %c0_27, %c0_28] : memref<9x8x4xf32, #tpu.memory_space<vmem>>, vector<1x8x4xf32>
    %51 = vector.shape_cast %50 : vector<1x8x4xf32> to vector<8x4xf32>
    %cst_29 = arith.constant dense<0.000000e+00> : vector<8x256xf32>
    %52 = tpu.matmul %51, %3, %cst_29 {dimension_numbers = #tpu.dot_dimension_numbers<[1], [0], [0], [1], [0, 0, 1, 1], [], []>} : vector<8x4xf32>, vector<4x256xf32>, vector<8x256xf32> -> vector<8x256xf32>
    %53 = arith.addf %49, %52 : vector<8x256xf32>
    %c255_i32 = arith.constant 255 : i32
    %54 = tpu.dynamic_rotate %3 by %c255_i32 dim 1 : vector<4x256xf32>, i32 -> vector<4x256xf32>
    %cst_30 = arith.constant 0.000000e+00 : f32
    %55 = vector.shape_cast %12 : vector<1x256xi1> to vector<1x256xi1>
    %56 = vector.broadcast %55 : vector<1x256xi1> to vector<4x256xi1>
    %57 = vector.broadcast %cst_30 : f32 to vector<4x256xf32>
    %58 = arith.select %56, %54, %57 : vector<4x256xi1>, vector<4x256xf32>
    %c5 = arith.constant 5 : index
    %c0_31 = arith.constant 0 : index
    %c0_32 = arith.constant 0 : index
    %59 = vector.load %arg2[%c5, %c0_31, %c0_32] : memref<9x8x4xf32, #tpu.memory_space<vmem>>, vector<1x8x4xf32>
    %60 = vector.shape_cast %59 : vector<1x8x4xf32> to vector<8x4xf32>
    %cst_33 = arith.constant dense<0.000000e+00> : vector<8x256xf32>
    %61 = tpu.matmul %60, %58, %cst_33 {dimension_numbers = #tpu.dot_dimension_numbers<[1], [0], [0], [1], [0, 0, 1, 1], [], []>} : vector<8x4xf32>, vector<4x256xf32>, vector<8x256xf32> -> vector<8x256xf32>
    %62 = arith.addf %53, %61 : vector<8x256xf32>
    %c241_i32 = arith.constant 241 : i32
    %63 = tpu.dynamic_rotate %3 by %c241_i32 dim 1 : vector<4x256xf32>, i32 -> vector<4x256xf32>
    %64 = arith.andi %8, %10 : vector<1x256xi1>
    %cst_34 = arith.constant 0.000000e+00 : f32
    %65 = vector.shape_cast %64 : vector<1x256xi1> to vector<1x256xi1>
    %66 = vector.broadcast %65 : vector<1x256xi1> to vector<4x256xi1>
    %67 = vector.broadcast %cst_34 : f32 to vector<4x256xf32>
    %68 = arith.select %66, %63, %67 : vector<4x256xi1>, vector<4x256xf32>
    %c6 = arith.constant 6 : index
    %c0_35 = arith.constant 0 : index
    %c0_36 = arith.constant 0 : index
    %69 = vector.load %arg2[%c6, %c0_35, %c0_36] : memref<9x8x4xf32, #tpu.memory_space<vmem>>, vector<1x8x4xf32>
    %70 = vector.shape_cast %69 : vector<1x8x4xf32> to vector<8x4xf32>
    %cst_37 = arith.constant dense<0.000000e+00> : vector<8x256xf32>
    %71 = tpu.matmul %70, %68, %cst_37 {dimension_numbers = #tpu.dot_dimension_numbers<[1], [0], [0], [1], [0, 0, 1, 1], [], []>} : vector<8x4xf32>, vector<4x256xf32>, vector<8x256xf32> -> vector<8x256xf32>
    %72 = arith.addf %62, %71 : vector<8x256xf32>
    %c240_i32 = arith.constant 240 : i32
    %73 = tpu.dynamic_rotate %3 by %c240_i32 dim 1 : vector<4x256xf32>, i32 -> vector<4x256xf32>
    %cst_38 = arith.constant 0.000000e+00 : f32
    %74 = vector.shape_cast %8 : vector<1x256xi1> to vector<1x256xi1>
    %75 = vector.broadcast %74 : vector<1x256xi1> to vector<4x256xi1>
    %76 = vector.broadcast %cst_38 : f32 to vector<4x256xf32>
    %77 = arith.select %75, %73, %76 : vector<4x256xi1>, vector<4x256xf32>
    %c7 = arith.constant 7 : index
    %c0_39 = arith.constant 0 : index
    %c0_40 = arith.constant 0 : index
    %78 = vector.load %arg2[%c7, %c0_39, %c0_40] : memref<9x8x4xf32, #tpu.memory_space<vmem>>, vector<1x8x4xf32>
    %79 = vector.shape_cast %78 : vector<1x8x4xf32> to vector<8x4xf32>
    %cst_41 = arith.constant dense<0.000000e+00> : vector<8x256xf32>
    %80 = tpu.matmul %79, %77, %cst_41 {dimension_numbers = #tpu.dot_dimension_numbers<[1], [0], [0], [1], [0, 0, 1, 1], [], []>} : vector<8x4xf32>, vector<4x256xf32>, vector<8x256xf32> -> vector<8x256xf32>
    %81 = arith.addf %72, %80 : vector<8x256xf32>
    %c239_i32 = arith.constant 239 : i32
    %82 = tpu.dynamic_rotate %3 by %c239_i32 dim 1 : vector<4x256xf32>, i32 -> vector<4x256xf32>
    %83 = arith.andi %8, %12 : vector<1x256xi1>
    %cst_42 = arith.constant 0.000000e+00 : f32
    %84 = vector.shape_cast %83 : vector<1x256xi1> to vector<1x256xi1>
    %85 = vector.broadcast %84 : vector<1x256xi1> to vector<4x256xi1>
    %86 = vector.broadcast %cst_42 : f32 to vector<4x256xf32>
    %87 = arith.select %85, %82, %86 : vector<4x256xi1>, vector<4x256xf32>
    %c8 = arith.constant 8 : index
    %c0_43 = arith.constant 0 : index
    %c0_44 = arith.constant 0 : index
    %88 = vector.load %arg2[%c8, %c0_43, %c0_44] : memref<9x8x4xf32, #tpu.memory_space<vmem>>, vector<1x8x4xf32>
    %89 = vector.shape_cast %88 : vector<1x8x4xf32> to vector<8x4xf32>
    %cst_45 = arith.constant dense<0.000000e+00> : vector<8x256xf32>
    %90 = tpu.matmul %89, %87, %cst_45 {dimension_numbers = #tpu.dot_dimension_numbers<[1], [0], [0], [1], [0, 0, 1, 1], [], []>} : vector<8x4xf32>, vector<4x256xf32>, vector<8x256xf32> -> vector<8x256xf32>
    %91 = arith.addf %81, %90 : vector<8x256xf32>
    %92 = vector.broadcast %4 : vector<8x1xf32> to vector<8x256xf32>
    %93 = arith.addf %91, %92 : vector<8x256xf32>
    %cst_46 = arith.constant 0.000000e+00 : f32
    %94 = vector.broadcast %cst_46 : f32 to vector<8x256xf32>
    %95 = arith.maximumf %93, %94 : vector<8x256xf32>
    %c0_47 = arith.constant 0 : index
    %c0_48 = arith.constant 0 : index
    %96 = vector.load %arg5[%c0_47, %c0_48] : memref<8x1xf32, #tpu.memory_space<vmem>>, vector<8x1xf32>
    %c0_i32_49 = arith.constant 0 : i32
    %97 = vector.broadcast %c0_i32_49 : i32 to vector<1x256xi32>
    %98 = arith.cmpi sgt, %0, %97 : vector<1x256xi32>
    %c15_i32_50 = arith.constant 15 : i32
    %99 = vector.broadcast %c15_i32_50 : i32 to vector<1x256xi32>
    %100 = arith.cmpi slt, %0, %99 : vector<1x256xi32>
    %c0_i32_51 = arith.constant 0 : i32
    %101 = vector.broadcast %c0_i32_51 : i32 to vector<1x256xi32>
    %102 = arith.cmpi sgt, %1, %101 : vector<1x256xi32>
    %c15_i32_52 = arith.constant 15 : i32
    %103 = vector.broadcast %c15_i32_52 : i32 to vector<1x256xi32>
    %104 = arith.cmpi slt, %1, %103 : vector<1x256xi32>
    %c17_i32_53 = arith.constant 17 : i32
    %105 = tpu.dynamic_rotate %95 by %c17_i32_53 dim 1 : vector<8x256xf32>, i32 -> vector<8x256xf32>
    %106 = arith.andi %98, %102 : vector<1x256xi1>
    %cst_54 = arith.constant 0.000000e+00 : f32
    %107 = vector.shape_cast %106 : vector<1x256xi1> to vector<1x256xi1>
    %108 = vector.broadcast %107 : vector<1x256xi1> to vector<8x256xi1>
    %109 = vector.broadcast %cst_54 : f32 to vector<8x256xf32>
    %110 = arith.select %108, %105, %109 : vector<8x256xi1>, vector<8x256xf32>
    %c0_55 = arith.constant 0 : index
    %c0_56 = arith.constant 0 : index
    %c0_57 = arith.constant 0 : index
    %111 = vector.load %arg4[%c0_55, %c0_56, %c0_57] : memref<9x8x8xf32, #tpu.memory_space<vmem>>, vector<1x8x8xf32>
    %112 = vector.shape_cast %111 : vector<1x8x8xf32> to vector<8x8xf32>
    %cst_58 = arith.constant dense<0.000000e+00> : vector<8x256xf32>
    %113 = tpu.matmul %112, %110, %cst_58 {dimension_numbers = #tpu.dot_dimension_numbers<[1], [0], [0], [1], [0, 0, 1, 1], [], []>} : vector<8x8xf32>, vector<8x256xf32>, vector<8x256xf32> -> vector<8x256xf32>
    %c16_i32_59 = arith.constant 16 : i32
    %114 = tpu.dynamic_rotate %95 by %c16_i32_59 dim 1 : vector<8x256xf32>, i32 -> vector<8x256xf32>
    %cst_60 = arith.constant 0.000000e+00 : f32
    %115 = vector.shape_cast %98 : vector<1x256xi1> to vector<1x256xi1>
    %116 = vector.broadcast %115 : vector<1x256xi1> to vector<8x256xi1>
    %117 = vector.broadcast %cst_60 : f32 to vector<8x256xf32>
    %118 = arith.select %116, %114, %117 : vector<8x256xi1>, vector<8x256xf32>
    %c1_61 = arith.constant 1 : index
    %c0_62 = arith.constant 0 : index
    %c0_63 = arith.constant 0 : index
    %119 = vector.load %arg4[%c1_61, %c0_62, %c0_63] : memref<9x8x8xf32, #tpu.memory_space<vmem>>, vector<1x8x8xf32>
    %120 = vector.shape_cast %119 : vector<1x8x8xf32> to vector<8x8xf32>
    %cst_64 = arith.constant dense<0.000000e+00> : vector<8x256xf32>
    %121 = tpu.matmul %120, %118, %cst_64 {dimension_numbers = #tpu.dot_dimension_numbers<[1], [0], [0], [1], [0, 0, 1, 1], [], []>} : vector<8x8xf32>, vector<8x256xf32>, vector<8x256xf32> -> vector<8x256xf32>
    %122 = arith.addf %113, %121 : vector<8x256xf32>
    %c15_i32_65 = arith.constant 15 : i32
    %123 = tpu.dynamic_rotate %95 by %c15_i32_65 dim 1 : vector<8x256xf32>, i32 -> vector<8x256xf32>
    %124 = arith.andi %98, %104 : vector<1x256xi1>
    %cst_66 = arith.constant 0.000000e+00 : f32
    %125 = vector.shape_cast %124 : vector<1x256xi1> to vector<1x256xi1>
    %126 = vector.broadcast %125 : vector<1x256xi1> to vector<8x256xi1>
    %127 = vector.broadcast %cst_66 : f32 to vector<8x256xf32>
    %128 = arith.select %126, %123, %127 : vector<8x256xi1>, vector<8x256xf32>
    %c2_67 = arith.constant 2 : index
    %c0_68 = arith.constant 0 : index
    %c0_69 = arith.constant 0 : index
    %129 = vector.load %arg4[%c2_67, %c0_68, %c0_69] : memref<9x8x8xf32, #tpu.memory_space<vmem>>, vector<1x8x8xf32>
    %130 = vector.shape_cast %129 : vector<1x8x8xf32> to vector<8x8xf32>
    %cst_70 = arith.constant dense<0.000000e+00> : vector<8x256xf32>
    %131 = tpu.matmul %130, %128, %cst_70 {dimension_numbers = #tpu.dot_dimension_numbers<[1], [0], [0], [1], [0, 0, 1, 1], [], []>} : vector<8x8xf32>, vector<8x256xf32>, vector<8x256xf32> -> vector<8x256xf32>
    %132 = arith.addf %122, %131 : vector<8x256xf32>
    %c1_i32_71 = arith.constant 1 : i32
    %133 = tpu.dynamic_rotate %95 by %c1_i32_71 dim 1 : vector<8x256xf32>, i32 -> vector<8x256xf32>
    %cst_72 = arith.constant 0.000000e+00 : f32
    %134 = vector.shape_cast %102 : vector<1x256xi1> to vector<1x256xi1>
    %135 = vector.broadcast %134 : vector<1x256xi1> to vector<8x256xi1>
    %136 = vector.broadcast %cst_72 : f32 to vector<8x256xf32>
    %137 = arith.select %135, %133, %136 : vector<8x256xi1>, vector<8x256xf32>
    %c3_73 = arith.constant 3 : index
    %c0_74 = arith.constant 0 : index
    %c0_75 = arith.constant 0 : index
    %138 = vector.load %arg4[%c3_73, %c0_74, %c0_75] : memref<9x8x8xf32, #tpu.memory_space<vmem>>, vector<1x8x8xf32>
    %139 = vector.shape_cast %138 : vector<1x8x8xf32> to vector<8x8xf32>
    %cst_76 = arith.constant dense<0.000000e+00> : vector<8x256xf32>
    %140 = tpu.matmul %139, %137, %cst_76 {dimension_numbers = #tpu.dot_dimension_numbers<[1], [0], [0], [1], [0, 0, 1, 1], [], []>} : vector<8x8xf32>, vector<8x256xf32>, vector<8x256xf32> -> vector<8x256xf32>
    %141 = arith.addf %132, %140 : vector<8x256xf32>
    %c4_77 = arith.constant 4 : index
    %c0_78 = arith.constant 0 : index
    %c0_79 = arith.constant 0 : index
    %142 = vector.load %arg4[%c4_77, %c0_78, %c0_79] : memref<9x8x8xf32, #tpu.memory_space<vmem>>, vector<1x8x8xf32>
    %143 = vector.shape_cast %142 : vector<1x8x8xf32> to vector<8x8xf32>
    %cst_80 = arith.constant dense<0.000000e+00> : vector<8x256xf32>
    %144 = tpu.matmul %143, %95, %cst_80 {dimension_numbers = #tpu.dot_dimension_numbers<[1], [0], [0], [1], [0, 0, 1, 1], [], []>} : vector<8x8xf32>, vector<8x256xf32>, vector<8x256xf32> -> vector<8x256xf32>
    %145 = arith.addf %141, %144 : vector<8x256xf32>
    %c255_i32_81 = arith.constant 255 : i32
    %146 = tpu.dynamic_rotate %95 by %c255_i32_81 dim 1 : vector<8x256xf32>, i32 -> vector<8x256xf32>
    %cst_82 = arith.constant 0.000000e+00 : f32
    %147 = vector.shape_cast %104 : vector<1x256xi1> to vector<1x256xi1>
    %148 = vector.broadcast %147 : vector<1x256xi1> to vector<8x256xi1>
    %149 = vector.broadcast %cst_82 : f32 to vector<8x256xf32>
    %150 = arith.select %148, %146, %149 : vector<8x256xi1>, vector<8x256xf32>
    %c5_83 = arith.constant 5 : index
    %c0_84 = arith.constant 0 : index
    %c0_85 = arith.constant 0 : index
    %151 = vector.load %arg4[%c5_83, %c0_84, %c0_85] : memref<9x8x8xf32, #tpu.memory_space<vmem>>, vector<1x8x8xf32>
    %152 = vector.shape_cast %151 : vector<1x8x8xf32> to vector<8x8xf32>
    %cst_86 = arith.constant dense<0.000000e+00> : vector<8x256xf32>
    %153 = tpu.matmul %152, %150, %cst_86 {dimension_numbers = #tpu.dot_dimension_numbers<[1], [0], [0], [1], [0, 0, 1, 1], [], []>} : vector<8x8xf32>, vector<8x256xf32>, vector<8x256xf32> -> vector<8x256xf32>
    %154 = arith.addf %145, %153 : vector<8x256xf32>
    %c241_i32_87 = arith.constant 241 : i32
    %155 = tpu.dynamic_rotate %95 by %c241_i32_87 dim 1 : vector<8x256xf32>, i32 -> vector<8x256xf32>
    %156 = arith.andi %100, %102 : vector<1x256xi1>
    %cst_88 = arith.constant 0.000000e+00 : f32
    %157 = vector.shape_cast %156 : vector<1x256xi1> to vector<1x256xi1>
    %158 = vector.broadcast %157 : vector<1x256xi1> to vector<8x256xi1>
    %159 = vector.broadcast %cst_88 : f32 to vector<8x256xf32>
    %160 = arith.select %158, %155, %159 : vector<8x256xi1>, vector<8x256xf32>
    %c6_89 = arith.constant 6 : index
    %c0_90 = arith.constant 0 : index
    %c0_91 = arith.constant 0 : index
    %161 = vector.load %arg4[%c6_89, %c0_90, %c0_91] : memref<9x8x8xf32, #tpu.memory_space<vmem>>, vector<1x8x8xf32>
    %162 = vector.shape_cast %161 : vector<1x8x8xf32> to vector<8x8xf32>
    %cst_92 = arith.constant dense<0.000000e+00> : vector<8x256xf32>
    %163 = tpu.matmul %162, %160, %cst_92 {dimension_numbers = #tpu.dot_dimension_numbers<[1], [0], [0], [1], [0, 0, 1, 1], [], []>} : vector<8x8xf32>, vector<8x256xf32>, vector<8x256xf32> -> vector<8x256xf32>
    %164 = arith.addf %154, %163 : vector<8x256xf32>
    %c240_i32_93 = arith.constant 240 : i32
    %165 = tpu.dynamic_rotate %95 by %c240_i32_93 dim 1 : vector<8x256xf32>, i32 -> vector<8x256xf32>
    %cst_94 = arith.constant 0.000000e+00 : f32
    %166 = vector.shape_cast %100 : vector<1x256xi1> to vector<1x256xi1>
    %167 = vector.broadcast %166 : vector<1x256xi1> to vector<8x256xi1>
    %168 = vector.broadcast %cst_94 : f32 to vector<8x256xf32>
    %169 = arith.select %167, %165, %168 : vector<8x256xi1>, vector<8x256xf32>
    %c7_95 = arith.constant 7 : index
    %c0_96 = arith.constant 0 : index
    %c0_97 = arith.constant 0 : index
    %170 = vector.load %arg4[%c7_95, %c0_96, %c0_97] : memref<9x8x8xf32, #tpu.memory_space<vmem>>, vector<1x8x8xf32>
    %171 = vector.shape_cast %170 : vector<1x8x8xf32> to vector<8x8xf32>
    %cst_98 = arith.constant dense<0.000000e+00> : vector<8x256xf32>
    %172 = tpu.matmul %171, %169, %cst_98 {dimension_numbers = #tpu.dot_dimension_numbers<[1], [0], [0], [1], [0, 0, 1, 1], [], []>} : vector<8x8xf32>, vector<8x256xf32>, vector<8x256xf32> -> vector<8x256xf32>
    %173 = arith.addf %164, %172 : vector<8x256xf32>
    %c239_i32_99 = arith.constant 239 : i32
    %174 = tpu.dynamic_rotate %95 by %c239_i32_99 dim 1 : vector<8x256xf32>, i32 -> vector<8x256xf32>
    %175 = arith.andi %100, %104 : vector<1x256xi1>
    %cst_100 = arith.constant 0.000000e+00 : f32
    %176 = vector.shape_cast %175 : vector<1x256xi1> to vector<1x256xi1>
    %177 = vector.broadcast %176 : vector<1x256xi1> to vector<8x256xi1>
    %178 = vector.broadcast %cst_100 : f32 to vector<8x256xf32>
    %179 = arith.select %177, %174, %178 : vector<8x256xi1>, vector<8x256xf32>
    %c8_101 = arith.constant 8 : index
    %c0_102 = arith.constant 0 : index
    %c0_103 = arith.constant 0 : index
    %180 = vector.load %arg4[%c8_101, %c0_102, %c0_103] : memref<9x8x8xf32, #tpu.memory_space<vmem>>, vector<1x8x8xf32>
    %181 = vector.shape_cast %180 : vector<1x8x8xf32> to vector<8x8xf32>
    %cst_104 = arith.constant dense<0.000000e+00> : vector<8x256xf32>
    %182 = tpu.matmul %181, %179, %cst_104 {dimension_numbers = #tpu.dot_dimension_numbers<[1], [0], [0], [1], [0, 0, 1, 1], [], []>} : vector<8x8xf32>, vector<8x256xf32>, vector<8x256xf32> -> vector<8x256xf32>
    %183 = arith.addf %173, %182 : vector<8x256xf32>
    %184 = vector.broadcast %96 : vector<8x1xf32> to vector<8x256xf32>
    %185 = arith.addf %183, %184 : vector<8x256xf32>
    %cst_105 = arith.constant 0.000000e+00 : f32
    %186 = vector.broadcast %cst_105 : f32 to vector<8x256xf32>
    %187 = arith.maximumf %185, %186 : vector<8x256xf32>
    %c0_106 = arith.constant 0 : index
    %c0_107 = arith.constant 0 : index
    %c0_108 = arith.constant 0 : index
    %188 = vector.load %arg8[%c0_106, %c0_107, %c0_108] : memref<1x8x256xf32, #tpu.memory_space<vmem>>, vector<1x8x256xf32>
    %189 = vector.shape_cast %188 : vector<1x8x256xf32> to vector<8x256xf32>
    %190 = vector.shape_cast %187 : vector<8x256xf32> to vector<1x8x256xf32>
    tpu.vector_store %arg8[%c0_106, %c0_107, %c0_108], %190 {strides = array<i32>} : memref<1x8x256xf32, #tpu.memory_space<vmem>>, vector<1x8x256xf32>,
    return
  }
  func.func @transform_0(%arg0: i32) -> (i32, i32, i32) {
    %c0_i32 = arith.constant 0 : i32
    %c0_i32_0 = arith.constant 0 : i32
    %c0_i32_1 = arith.constant 0 : i32
    return %arg0, %c0_i32, %c0_i32_0 : i32, i32, i32
  }
  func.func @transform_1(%arg0: i32) -> (i32, i32, i32) {
    %c0_i32 = arith.constant 0 : i32
    %c0_i32_0 = arith.constant 0 : i32
    %c0_i32_1 = arith.constant 0 : i32
    %c0_i32_2 = arith.constant 0 : i32
    return %c0_i32, %c0_i32_0, %c0_i32_1 : i32, i32, i32
  }
  func.func @transform_2(%arg0: i32) -> (i32, i32) {
    %c0_i32 = arith.constant 0 : i32
    %c0_i32_0 = arith.constant 0 : i32
    %c0_i32_1 = arith.constant 0 : i32
    return %c0_i32, %c0_i32_0 : i32, i32
  }
  func.func @transform_3(%arg0: i32) -> (i32, i32, i32) {
    %c0_i32 = arith.constant 0 : i32
    %c0_i32_0 = arith.constant 0 : i32
    %c0_i32_1 = arith.constant 0 : i32
    %c0_i32_2 = arith.constant 0 : i32
    return %c0_i32, %c0_i32_0, %c0_i32_1 : i32, i32, i32
  }
  func.func @transform_4(%arg0: i32) -> (i32, i32) {
    %c0_i32 = arith.constant 0 : i32
    %c0_i32_0 = arith.constant 0 : i32
    %c0_i32_1 = arith.constant 0 : i32
    return %c0_i32, %c0_i32_0 : i32, i32
  }
  func.func @transform_5(%arg0: i32) -> (i32, i32) {
    %c0_i32 = arith.constant 0 : i32
    %c0_i32_0 = arith.constant 0 : i32
    %c0_i32_1 = arith.constant 0 : i32
    return %c0_i32, %c0_i32_0 : i32, i32
  }
  func.func @transform_6(%arg0: i32) -> (i32, i32) {
    %c0_i32 = arith.constant 0 : i32
    %c0_i32_0 = arith.constant 0 : i32
    %c0_i32_1 = arith.constant 0 : i32
    return %c0_i32, %c0_i32_0 : i32, i32
  }
  func.func @transform_7(%arg0: i32) -> (i32, i32, i32) {
    %c0_i32 = arith.constant 0 : i32
    %c0_i32_0 = arith.constant 0 : i32
    %c0_i32_1 = arith.constant 0 : i32
    return %arg0, %c0_i32, %c0_i32_0 : i32, i32, i32
  }
}

</mosaic_0001>

<llo_original>
// kernel: tpu_custom_call.1
$region0: #{tpu_custom_call.1}
  #allocation0 [shape = 'u32[]', space=smem, size = 0x4, offset = 0x4, fixed_abs, tag = 'smem constant byte address 0x4 - core index']
  #allocation1 [shape = 'u32[72,128]{1,0:T(1,128)}', space=vmem, size = 0x9000, scoped, tag = 'internal scratch']
  %s0 = inlined_call_operand.vmem [shape: f32[2,4,256], index: 0, kind: input, shape index: {}]
  %s1 = inlined_call_operand.vmem [shape: f32[9,8,4], index: 1, kind: input, shape index: {}]
  %s2 = inlined_call_operand.vmem [shape: f32[8,1], index: 2, kind: input, shape index: {}]
  %s3 = inlined_call_operand.vmem [shape: f32[9,8,8], index: 3, kind: input, shape index: {}]
  %s4 = inlined_call_operand.vmem [shape: f32[8,1], index: 4, kind: input, shape index: {}]
  %s5 = inlined_call_operand.vmem [shape: s32[1,256], index: 5, kind: input, shape index: {}]
  %s6 = inlined_call_operand.vmem [shape: s32[1,256], index: 6, kind: input, shape index: {}]
  %s7 = inlined_call_operand.hbm [shape: f32[2,8,256], index: 7, kind: output, shape index: {}]
  %s8 = sld [smem:[#allocation0]]
  $region61: #{tpu_custom_call.1} parent=0
    _
  %s10 = ssub.s32 1, %s8
  %s11 = scalar_select 0, %s10, %s8
  $region1: #{tpu_custom_call.1} parent=0
    #allocation2 [shape = 'u8[16384]{0}', space=vmem, size = 0x4000, scoped, tag = 'output window, operand 0']
    #allocation3 [shape = 's32[2]{0}', space=sflag, size = 0x8, scoped, tag = 'scoped memory for tpu_custom_call.1']
    %12 = vsyncpa [#allocation3], 0
    %s13 = scalar_lea.sflag [#allocation3], 1
    %14 = vsyncpa %s13, 0
    loop: start=0, step=1, limit=4
    $region2: #{tpu_custom_call.1} parent=1 // loop_pre_header
      _
    $region3: #{tpu_custom_call.1} parent=1 // loop_header
      %s16 = sphi 0, %s20
      %p17 = scmp.ge.s32.totalorder %s16, 4
      %s26 = sphi 0, %s28
      %s29 = sphi 0, %s26
      %s30 = sphi 0, %s29
      %s46 = sphi 0, %s30
      %s50 = sphi 0, %s50
      %s52 = sphi 0, %s50
      %s53 = sphi 0, %s52
      %s67 = sphi 0, %s53
      %s71 = sphi 0, %s71
      %s73 = sphi 0, %s71
      %s74 = sphi 0, %s73
      %s88 = sphi 0, %s74
      %s92 = sphi 0, %s92
      %s94 = sphi 0, %s92
      %s95 = sphi 0, %s94
      %s109 = sphi 0, %s95
      %s113 = sphi 0, %s113
      %s115 = sphi 0, %s113
      %s116 = sphi 0, %s115
      %s130 = sphi 0, %s116
      %s134 = sphi 0, %s134
      %s136 = sphi 0, %s134
      %s137 = sphi 0, %s136
      %s151 = sphi 0, %s137
      %s155 = sphi 0, %s155
      %s157 = sphi 0, %s155
      %s158 = sphi 0, %s157
      %s172 = sphi 0, %s158
      %s178 = sphi 0, %s180
      %s181 = sphi 0, %s178
      %s182 = sphi 0, %s181
      %s198 = sphi 0, %s182
    $region4: #{tpu_custom_call.1} parent=1 // loop_header_branch
      %19 = sbr.rel (%p17) target = $region8
    $region5: #{tpu_custom_call.1} parent=1 // loop_body
      %s21 = ssub.s32 %s16, 1
      %s22 = ssub.s32 %s16, 2
      %s23 = sadd.s32 %s16, 1
      %s24 = ssub.s32 %s16, %s23
      %p25 = scmp.eq.s32.totalorder %s24, 0
      %s27 = sadd.s32 %s26, 1
      %s28 = scalar_select %p25, %s26, %s27
      %p31 = pneg %p25
      %p32 = scmp.eq.s32.totalorder %s16, 1
      %p33 = por %p31, %p32
      %p34 = scmp.ne.s32.totalorder %s26, %s29
      %p35 = scmp.eq.s32.totalorder %s16, 0
      %p36 = por %p34, %p35
      %p37 = scmp.ne.s32.totalorder %s26, %s29
      %p38 = scmp.eq.s32.totalorder %s21, 1
      %p39 = por %p37, %p38
      %p40 = scmp.ne.s32.totalorder %s29, %s30
      %p41 = scmp.eq.s32.totalorder %s21, 0
      %p42 = por %p40, %p41
      %p43 = scmp.ne.s32.totalorder %s29, %s30
      %p44 = scmp.eq.s32.totalorder %s22, 1
      %p45 = por %p43, %p44
      %p47 = scmp.ne.s32.totalorder %s30, %s46
      %p48 = scmp.eq.s32.totalorder %s22, 0
      %p49 = por %p47, %p48
      %s51 = sadd.s32 %s50, 1
      %p54 = scmp.eq.s32.totalorder %s16, 1
      %p55 = scmp.ne.s32.totalorder %s50, %s52
      %p56 = scmp.eq.s32.totalorder %s16, 0
      %p57 = por %p55, %p56
      %p58 = scmp.ne.s32.totalorder %s50, %s52
      %p59 = scmp.eq.s32.totalorder %s21, 1
      %p60 = por %p58, %p59
      %p61 = scmp.ne.s32.totalorder %s52, %s53
      %p62 = scmp.eq.s32.totalorder %s21, 0
      %p63 = por %p61, %p62
      %p64 = scmp.ne.s32.totalorder %s52, %s53
      %p65 = scmp.eq.s32.totalorder %s22, 1
      %p66 = por %p64, %p65
      %p68 = scmp.ne.s32.totalorder %s53, %s67
      %p69 = scmp.eq.s32.totalorder %s22, 0
      %p70 = por %p68, %p69
      %s72 = sadd.s32 %s71, 1
      %p75 = scmp.eq.s32.totalorder %s16, 1
      %p76 = scmp.ne.s32.totalorder %s71, %s73
      %p77 = scmp.eq.s32.totalorder %s16, 0
      %p78 = por %p76, %p77
      %p79 = scmp.ne.s32.totalorder %s71, %s73
      %p80 = scmp.eq.s32.totalorder %s21, 1
      %p81 = por %p79, %p80
      %p82 = scmp.ne.s32.totalorder %s73, %s74
      %p83 = scmp.eq.s32.totalorder %s21, 0
      %p84 = por %p82, %p83
      %p85 = scmp.ne.s32.totalorder %s73, %s74
      %p86 = scmp.eq.s32.totalorder %s22, 1
      %p87 = por %p85, %p86
      %p89 = scmp.ne.s32.totalorder %s74, %s88
      %p90 = scmp.eq.s32.totalorder %s22, 0
      %p91 = por %p89, %p90
      %s93 = sadd.s32 %s92, 1
      %p96 = scmp.eq.s32.totalorder %s16, 1
      %p97 = scmp.ne.s32.totalorder %s92, %s94
      %p98 = scmp.eq.s32.totalorder %s16, 0
      %p99 = por %p97, %p98
      %p100 = scmp.ne.s32.totalorder %s92, %s94
      %p101 = scmp.eq.s32.totalorder %s21, 1
      %p102 = por %p100, %p101
      %p103 = scmp.ne.s32.totalorder %s94, %s95
      %p104 = scmp.eq.s32.totalorder %s21, 0
      %p105 = por %p103, %p104
      %p106 = scmp.ne.s32.totalorder %s94, %s95
      %p107 = scmp.eq.s32.totalorder %s22, 1
      %p108 = por %p106, %p107
      %p110 = scmp.ne.s32.totalorder %s95, %s109
      %p111 = scmp.eq.s32.totalorder %s22, 0
      %p112 = por %p110, %p111
      %s114 = sadd.s32 %s113, 1
      %p117 = scmp.eq.s32.totalorder %s16, 1
      %p118 = scmp.ne.s32.totalorder %s113, %s115
      %p119 = scmp.eq.s32.totalorder %s16, 0
      %p120 = por %p118, %p119
      %p121 = scmp.ne.s32.totalorder %s113, %s115
      %p122 = scmp.eq.s32.totalorder %s21, 1
      %p123 = por %p121, %p122
      %p124 = scmp.ne.s32.totalorder %s115, %s116
      %p125 = scmp.eq.s32.totalorder %s21, 0
      %p126 = por %p124, %p125
      %p127 = scmp.ne.s32.totalorder %s115, %s116
      %p128 = scmp.eq.s32.totalorder %s22, 1
      %p129 = por %p127, %p128
      %p131 = scmp.ne.s32.totalorder %s116, %s130
      %p132 = scmp.eq.s32.totalorder %s22, 0
      %p133 = por %p131, %p132
      %s135 = sadd.s32 %s134, 1
      %p138 = scmp.eq.s32.totalorder %s16, 1
      %p139 = scmp.ne.s32.totalorder %s134, %s136
      %p140 = scmp.eq.s32.totalorder %s16, 0
      %p141 = por %p139, %p140
      %p142 = scmp.ne.s32.totalorder %s134, %s136
      %p143 = scmp.eq.s32.totalorder %s21, 1
      %p144 = por %p142, %p143
      %p145 = scmp.ne.s32.totalorder %s136, %s137
      %p146 = scmp.eq.s32.totalorder %s21, 0
      %p147 = por %p145, %p146
      %p148 = scmp.ne.s32.totalorder %s136, %s137
      %p149 = scmp.eq.s32.totalorder %s22, 1
      %p150 = por %p148, %p149
      %p152 = scmp.ne.s32.totalorder %s137, %s151
      %p153 = scmp.eq.s32.totalorder %s22, 0
      %p154 = por %p152, %p153
      %s156 = sadd.s32 %s155, 1
      %p159 = scmp.eq.s32.totalorder %s16, 1
      %p160 = scmp.ne.s32.totalorder %s155, %s157
      %p161 = scmp.eq.s32.totalorder %s16, 0
      %p162 = por %p160, %p161
      %p163 = scmp.ne.s32.totalorder %s155, %s157
      %p164 = scmp.eq.s32.totalorder %s21, 1
      %p165 = por %p163, %p164
      %p166 = scmp.ne.s32.totalorder %s157, %s158
      %p167 = scmp.eq.s32.totalorder %s21, 0
      %p168 = por %p166, %p167
      %p169 = scmp.ne.s32.totalorder %s157, %s158
      %p170 = scmp.eq.s32.totalorder %s22, 1
      %p171 = por %p169, %p170
      %p173 = scmp.ne.s32.totalorder %s158, %s172
      %p174 = scmp.eq.s32.totalorder %s22, 0
      %p175 = por %p173, %p174
      %s176 = ssub.s32 %s16, %s23
      %p177 = scmp.eq.s32.totalorder %s176, 0
      %s179 = sadd.s32 %s178, 1
      %s180 = scalar_select %p177, %s178, %s179
      %p183 = pneg %p177
      %p184 = scmp.eq.s32.totalorder %s16, 1
      %p185 = por %p183, %p184
      %p186 = scmp.ne.s32.totalorder %s178, %s181
      %p187 = scmp.eq.s32.totalorder %s16, 0
      %p188 = por %p186, %p187
      %p189 = scmp.ne.s32.totalorder %s178, %s181
      %p190 = scmp.eq.s32.totalorder %s21, 1
      %p191 = por %p189, %p190
      %p192 = scmp.ne.s32.totalorder %s181, %s182
      %p193 = scmp.eq.s32.totalorder %s21, 0
      %p194 = por %p192, %p193
      %p195 = scmp.ne.s32.totalorder %s181, %s182
      %p196 = scmp.eq.s32.totalorder %s22, 1
      %p197 = por %p195, %p196
      %p199 = scmp.ne.s32.totalorder %s182, %s198
      %p200 = scmp.eq.s32.totalorder %s22, 0
      %p201 = por %p199, %p200
      %p202 = scmp.le.s32.totalorder 1, %s16
      %p203 = scmp.lt.s32.totalorder %s16, 3
      %p204 = pnand %p202, %p203
      %p205 = pneg %p204
      // Predicated region
      $region9: #{tpu_custom_call.1} parent=5 // pred_check
        _
      $region10: #{tpu_custom_call.1} parent=5 // pred_check_branch
        %207 = sbr.rel (%p204) target = $region12
      $region11: #{tpu_custom_call.1} parent=5 // pred_region
        %s208 = ssub.s32 %s16, 1
        // Predicated region
        $region13: #{tpu_custom_call.1} parent=11 // pred_check
          %p209 = pneg %p63
        $region14: #{tpu_custom_call.1} parent=11 // pred_check_branch
          %211 = sbr.rel (%p209) target = $region16
        $region15: #{tpu_custom_call.1} parent=11 // pred_region
          _
        $region16: #{tpu_custom_call.1} parent=11 // pred_fallthru
          _
        // Predicated region
        $region17: #{tpu_custom_call.1} parent=11 // pred_check
          %p212 = pneg %p84
        $region18: #{tpu_custom_call.1} parent=11 // pred_check_branch
          %214 = sbr.rel (%p212) target = $region20
        $region19: #{tpu_custom_call.1} parent=11 // pred_region
          _
        $region20: #{tpu_custom_call.1} parent=11 // pred_fallthru
          _
        // Predicated region
        $region21: #{tpu_custom_call.1} parent=11 // pred_check
          %p215 = pneg %p105
        $region22: #{tpu_custom_call.1} parent=11 // pred_check_branch
          %217 = sbr.rel (%p215) target = $region24
        $region23: #{tpu_custom_call.1} parent=11 // pred_region
          _
        $region24: #{tpu_custom_call.1} parent=11 // pred_fallthru
          _
        // Predicated region
        $region25: #{tpu_custom_call.1} parent=11 // pred_check
          %p218 = pneg %p126
        $region26: #{tpu_custom_call.1} parent=11 // pred_check_branch
          %220 = sbr.rel (%p218) target = $region28
        $region27: #{tpu_custom_call.1} parent=11 // pred_region
          _
        $region28: #{tpu_custom_call.1} parent=11 // pred_fallthru
          _
        // Predicated region
        $region29: #{tpu_custom_call.1} parent=11 // pred_check
          %p221 = pneg %p147
        $region30: #{tpu_custom_call.1} parent=11 // pred_check_branch
          %223 = sbr.rel (%p221) target = $region32
        $region31: #{tpu_custom_call.1} parent=11 // pred_region
          _
        $region32: #{tpu_custom_call.1} parent=11 // pred_fallthru
          _
        // Predicated region
        $region33: #{tpu_custom_call.1} parent=11 // pred_check
          %p224 = pneg %p168
        $region34: #{tpu_custom_call.1} parent=11 // pred_check_branch
          %226 = sbr.rel (%p224) target = $region36
        $region35: #{tpu_custom_call.1} parent=11 // pred_region
          _
        $region36: #{tpu_custom_call.1} parent=11 // pred_fallthru
          _
      $region12: #{tpu_custom_call.1} parent=5 // pred_fallthru
        _
      %p227 = scmp.lt.s32.totalorder %s16, 2
      // Predicated region
      $region37: #{tpu_custom_call.1} parent=5 // pred_check
        %p228 = pneg %p227
      $region38: #{tpu_custom_call.1} parent=5 // pred_check_branch
        %230 = sbr.rel (%p228) target = $region40
      $region39: #{tpu_custom_call.1} parent=5 // pred_region
        // Predicated region
        $region41: #{tpu_custom_call.1} parent=39 // pred_check
          %p231 = pneg %p36
        $region42: #{tpu_custom_call.1} parent=39 // pred_check_branch
          %233 = sbr.rel (%p231) target = $region44
        $region43: #{tpu_custom_call.1} parent=39 // pred_region
          %p234 = scmp.lt.s32.totalorder %s16, 1
          %s235 = scalar_select %p234, %s16, 1
          %s236 = smul.addr %s235, 2
          %s237 = smul.addr %s236, 4
          %s238 = scalar_lea.vmem %s0, %s237
        $region44: #{tpu_custom_call.1} parent=39 // pred_fallthru
          _
      $region40: #{tpu_custom_call.1} parent=5 // pred_fallthru
        _
      %p239 = scmp.le.s32.totalorder 1, %s16
      %p240 = scmp.lt.s32.totalorder %s16, 3
      %p241 = pnand %p239, %p240
      %p242 = pneg %p241
      // Predicated region
      $region45: #{tpu_custom_call.1} parent=5 // pred_check
        _
      $region46: #{tpu_custom_call.1} parent=5 // pred_check_branch
        %244 = sbr.rel (%p241) target = $region48
      $region47: #{tpu_custom_call.1} parent=5 // pred_region
        %s245 = ssub.s32 %s16, 1
        %p246 = scmp.lt.s32.totalorder %s21, 1
        %s247 = scalar_select %p246, %s21, 1
        %s248 = smul.addr %s247, 2
        %s249 = smul.addr %s248, 4
        %s250 = scalar_lea.vmem %s0, %s249
        %p251 = pneg %p42
        %p252 = pneg %p39
        %p253 = pneg %p63
        %p254 = pneg %p60
        %p255 = pneg %p84
        %p256 = pneg %p81
        %p257 = pneg %p105
        %p258 = pneg %p102
        %p259 = pneg %p126
        %p260 = pneg %p123
        %p261 = pneg %p147
        %p262 = pneg %p144
        %p263 = pneg %p168
        %p264 = pneg %p165
        %p265 = pneg %p194
        %p266 = pneg %p191
        %s267 = sand.u32 %s181, 1
        %s268 = scalar_lea.sflag [#allocation3], %s267
        %s269 = sand.u32 %s181, 1
        %s270 = smul.addr %s269, 16
        %s271 = scalar_lea.vmem [#allocation2], %s270
        %p272 = scmp.lt.s32.totalorder %s21, 1
        %s273 = scalar_select %p272, %s21, 1
        %s274 = smul.addr %s273, 2
        %s275 = smul.addr %s274, 4
        %s276 = scalar_lea.vmem %s0, %s275
        %v277 = vld [vmem:[%s5] sm:$0x3]
        %v278 = vld [vmem:[%s6] sm:$0x3]
        %v279 = vld [vmem:[%s276] sm:$0xff]
        %v280 = vld [vmem:[%s2] sm:$0xff]
        %vm281 = vcmp.gt.s32.totalorder %v277, 0
        %vm282 = vcmp.lt.s32.totalorder %v277, 15
        %vm283 = vcmp.gt.s32.totalorder %v278, 0
        %vm284 = vcmp.lt.s32.totalorder %v278, 15
        %286 = vst [vmem:[#allocation1] ss:$2 sm:$0xff] %v279
        %v287 = vld.sshfl [vmem:[#allocation1] sm:$0xff pattern:$0x75316420]
        %v288 = vld.sshfl [vmem:[#allocation1 + $0x8] sm:$0xff pattern:$0x75316420]
        %291 = vrot.lane.b32.xlu0 %v287, 17
        %v292 = vpop.permute.xlu0 %291
        %293 = vrot.lane.b32.xlu0 %v288, 17
        %v294 = vpop.permute.xlu0 %293
        %v295 = vlaneseq
        %v296 = vand.u32 %v295, 127
        %vm297 = vcmp.lt.s32.totalorder %v296, 17
        %v298 = vsel %vm297, %v292, %v294
        %v299 = vsel %vm297, %v294, %v292
        %vm300 = vmand %vm281, %vm283
        %v301 = vsel %vm300, 1, 0
        %v302 = vperm.slane %v301, 0
        %v303 = vperm.slane %v301, 1
        %vm304 = vcmp.eq.s32.totalorder %v302, 1
        %vm305 = vcmp.eq.s32.totalorder %v303, 1
        %v306 = vsel %vm304, %v299, 0.0
        %v307 = vsel %vm305, %v298, 0.0
        %v308 = vld [vmem:[%s1] sm:$0xff]
        %309 = vst [vmem:[#allocation1] ss:$2 sm:$0xff] %v279
        %v310 = vld.sshfl [vmem:[#allocation1] sm:$0xff pattern:$0x75316420]
        %v311 = vld.sshfl [vmem:[#allocation1 + $0x8] sm:$0xff pattern:$0x75316420]
        %314 = vrot.lane.b32.xlu0 %v310, 16
        %v315 = vpop.permute.xlu0 %314
        %316 = vrot.lane.b32.xlu0 %v311, 16
        %v317 = vpop.permute.xlu0 %316
        %vm318 = vcmp.lt.s32.totalorder %v296, 16
        %v319 = vsel %vm318, %v315, %v317
        %v320 = vsel %vm318, %v317, %v315
        %v321 = vsel %vm281, 1, 0
        %v322 = vperm.slane %v321, 0
        %v323 = vperm.slane %v321, 1
        %vm324 = vcmp.eq.s32.totalorder %v322, 1
        %vm325 = vcmp.eq.s32.totalorder %v323, 1
        %v326 = vsel %vm324, %v320, 0.0
        %v327 = vsel %vm325, %v319, 0.0
        %s328 = scalar_lea.vmem %s1, 8
        %v329 = vld [vmem:[%s328] sm:$0xff]
        %vm330 = vcmask 31744
        %v332 = vsel %vm330, %v329, 0
        %vm334 = vcmask 1043456
        %v336 = vsel %vm334, %v326, 0
        %v339 = vsel %vm334, %v327, 0
        %341 = vmatpush.msra.mxu0 0.0
        %342 = vmatpush.msra.mxu0 0.0
        %343 = vmatpush.msra.mxu0 0.0
        %344 = vmatpush.msra.mxu0 0.0
        %345 = vmatpush.msra.mxu0 0.0
        %346 = vmatpush.msra.mxu0 0.0
        %347 = vmatpush.msra.mxu0 0.0
        %348 = vmatpush.msra.mxu0 0.0
        %349 = vmatpush.msra.mxu0 0.0
        %350 = vmatpush.msra.mxu0 0.0
        %351 = vmatpush.msra.mxu0 0.0
        %352 = vmatpush.msra.mxu0 0.0
        %353 = vmatpush.msra.mxu0 0.0
        %354 = vmatpush.msra.mxu0 0.0
        %355 = vmatpush.msra.mxu0 0.0
        %356 = vmatpush.msra.mxu0 %v336
        %357 = vmatmul.f32.gmra.mxu0 %v332
        %v358 = vpop.f32.mrf.mxu0
        %v359 = vadd.f32 0.0, %v358
        %360 = vdwg.mxu0
        %361 = vmatpush.msra.mxu0 0.0
        %362 = vmatpush.msra.mxu0 0.0
        %363 = vmatpush.msra.mxu0 0.0
        %364 = vmatpush.msra.mxu0 0.0
        %365 = vmatpush.msra.mxu0 0.0
        %366 = vmatpush.msra.mxu0 0.0
        %367 = vmatpush.msra.mxu0 0.0
        %368 = vmatpush.msra.mxu0 0.0
        %369 = vmatpush.msra.mxu0 0.0
        %370 = vmatpush.msra.mxu0 0.0
        %371 = vmatpush.msra.mxu0 0.0
        %372 = vmatpush.msra.mxu0 0.0
        %373 = vmatpush.msra.mxu0 0.0
        %374 = vmatpush.msra.mxu0 0.0
        %375 = vmatpush.msra.mxu0 0.0
        %376 = vmatpush.msra.mxu0 %v339
        %377 = vmatmul.f32.gmra.mxu0 %v332
        %v378 = vpop.f32.mrf.mxu0
        %v379 = vadd.f32 0.0, %v378
        %380 = vdwg.mxu0
        %v382 = vsel %vm330, %v308, 0
        %v385 = vsel %vm334, %v306, 0
        %v388 = vsel %vm334, %v307, 0
        %390 = vmatpush.msra.mxu0 0.0
        %391 = vmatpush.msra.mxu0 0.0
        %392 = vmatpush.msra.mxu0 0.0
        %393 = vmatpush.msra.mxu0 0.0
        %394 = vmatpush.msra.mxu0 0.0
        %395 = vmatpush.msra.mxu0 0.0
        %396 = vmatpush.msra.mxu0 0.0
        %397 = vmatpush.msra.mxu0 0.0
        %398 = vmatpush.msra.mxu0 0.0
        %399 = vmatpush.msra.mxu0 0.0
        %400 = vmatpush.msra.mxu0 0.0
        %401 = vmatpush.msra.mxu0 0.0
        %402 = vmatpush.msra.mxu0 0.0
        %403 = vmatpush.msra.mxu0 0.0
        %404 = vmatpush.msra.mxu0 0.0
        %405 = vmatpush.msra.mxu0 %v385
        %406 = vmatmul.f32.gmra.mxu0 %v382
        %v407 = vpop.f32.mrf.mxu0
        %v408 = vadd.f32 %v359, %v407
        %409 = vdwg.mxu0
        %410 = vmatpush.msra.mxu0 0.0
        %411 = vmatpush.msra.mxu0 0.0
        %412 = vmatpush.msra.mxu0 0.0
        %413 = vmatpush.msra.mxu0 0.0
        %414 = vmatpush.msra.mxu0 0.0
        %415 = vmatpush.msra.mxu0 0.0
        %416 = vmatpush.msra.mxu0 0.0
        %417 = vmatpush.msra.mxu0 0.0
        %418 = vmatpush.msra.mxu0 0.0
        %419 = vmatpush.msra.mxu0 0.0
        %420 = vmatpush.msra.mxu0 0.0
        %421 = vmatpush.msra.mxu0 0.0
        %422 = vmatpush.msra.mxu0 0.0
        %423 = vmatpush.msra.mxu0 0.0
        %424 = vmatpush.msra.mxu0 0.0
        %425 = vmatpush.msra.mxu0 %v388
        %426 = vmatmul.f32.gmra.mxu0 %v382
        %v427 = vpop.f32.mrf.mxu0
        %v428 = vadd.f32 %v379, %v427
        %429 = vdwg.mxu0
        %430 = vst [vmem:[#allocation1] ss:$2 sm:$0xff] %v279
        %v431 = vld.sshfl [vmem:[#allocation1] sm:$0xff pattern:$0x75316420]
        %v432 = vld.sshfl [vmem:[#allocation1 + $0x8] sm:$0xff pattern:$0x75316420]
        %435 = vrot.lane.b32.xlu0 %v431, 15
        %v436 = vpop.permute.xlu0 %435
        %437 = vrot.lane.b32.xlu0 %v432, 15
        %v438 = vpop.permute.xlu0 %437
        %vm439 = vcmp.lt.s32.totalorder %v296, 15
        %v440 = vsel %vm439, %v436, %v438
        %v441 = vsel %vm439, %v438, %v436
        %vm442 = vmand %vm281, %vm284
        %v443 = vsel %vm442, 1, 0
        %v444 = vperm.slane %v443, 0
        %v445 = vperm.slane %v443, 1
        %vm446 = vcmp.eq.s32.totalorder %v444, 1
        %vm447 = vcmp.eq.s32.totalorder %v445, 1
        %v448 = vsel %vm446, %v441, 0.0
        %v449 = vsel %vm447, %v440, 0.0
        %s450 = scalar_lea.vmem %s1, 16
        %v451 = vld [vmem:[%s450] sm:$0xff]
        %v453 = vsel %vm330, %v451, 0
        %v456 = vsel %vm334, %v448, 0
        %v459 = vsel %vm334, %v449, 0
        %461 = vmatpush.msra.mxu0 0.0
        %462 = vmatpush.msra.mxu0 0.0
        %463 = vmatpush.msra.mxu0 0.0
        %464 = vmatpush.msra.mxu0 0.0
        %465 = vmatpush.msra.mxu0 0.0
        %466 = vmatpush.msra.mxu0 0.0
        %467 = vmatpush.msra.mxu0 0.0
        %468 = vmatpush.msra.mxu0 0.0
        %469 = vmatpush.msra.mxu0 0.0
        %470 = vmatpush.msra.mxu0 0.0
        %471 = vmatpush.msra.mxu0 0.0
        %472 = vmatpush.msra.mxu0 0.0
        %473 = vmatpush.msra.mxu0 0.0
        %474 = vmatpush.msra.mxu0 0.0
        %475 = vmatpush.msra.mxu0 0.0
        %476 = vmatpush.msra.mxu0 %v456
        %477 = vmatmul.f32.gmra.mxu0 %v453
        %v478 = vpop.f32.mrf.mxu0
        %v479 = vadd.f32 0.0, %v478
        %480 = vdwg.mxu0
        %481 = vmatpush.msra.mxu0 0.0
        %482 = vmatpush.msra.mxu0 0.0
        %483 = vmatpush.msra.mxu0 0.0
        %484 = vmatpush.msra.mxu0 0.0
        %485 = vmatpush.msra.mxu0 0.0
        %486 = vmatpush.msra.mxu0 0.0
        %487 = vmatpush.msra.mxu0 0.0
        %488 = vmatpush.msra.mxu0 0.0
        %489 = vmatpush.msra.mxu0 0.0
        %490 = vmatpush.msra.mxu0 0.0
        %491 = vmatpush.msra.mxu0 0.0
        %492 = vmatpush.msra.mxu0 0.0
        %493 = vmatpush.msra.mxu0 0.0
        %494 = vmatpush.msra.mxu0 0.0
        %495 = vmatpush.msra.mxu0 0.0
        %496 = vmatpush.msra.mxu0 %v459
        %497 = vmatmul.f32.gmra.mxu0 %v453
        %v498 = vpop.f32.mrf.mxu0
        %v499 = vadd.f32 0.0, %v498
        %500 = vdwg.mxu0
        %v501 = vadd.f32 %v408, %v479
        %v502 = vadd.f32 %v428, %v499
        %503 = vst [vmem:[#allocation1] ss:$2 sm:$0xff] %v279
        %v504 = vld.sshfl [vmem:[#allocation1] sm:$0xff pattern:$0x75316420]
        %v505 = vld.sshfl [vmem:[#allocation1 + $0x8] sm:$0xff pattern:$0x75316420]
        %508 = vrot.lane.b32.xlu0 %v504, 1
        %v509 = vpop.permute.xlu0 %508
        %510 = vrot.lane.b32.xlu0 %v505, 1
        %v511 = vpop.permute.xlu0 %510
        %vm512 = vcmp.lt.s32.totalorder %v296, 1
        %v513 = vsel %vm512, %v509, %v511
        %v514 = vsel %vm512, %v511, %v509
        %v515 = vsel %vm283, 1, 0
        %v516 = vperm.slane %v515, 0
        %v517 = vperm.slane %v515, 1
        %vm518 = vcmp.eq.s32.totalorder %v516, 1
        %vm519 = vcmp.eq.s32.totalorder %v517, 1
        %v520 = vsel %vm518, %v514, 0.0
        %v521 = vsel %vm519, %v513, 0.0
        %s522 = scalar_lea.vmem %s1, 24
        %v523 = vld [vmem:[%s522] sm:$0xff]
        %v525 = vsel %vm330, %v523, 0
        %v528 = vsel %vm334, %v520, 0
        %v531 = vsel %vm334, %v521, 0
        %533 = vmatpush.msra.mxu0 0.0
        %534 = vmatpush.msra.mxu0 0.0
        %535 = vmatpush.msra.mxu0 0.0
        %536 = vmatpush.msra.mxu0 0.0
        %537 = vmatpush.msra.mxu0 0.0
        %538 = vmatpush.msra.mxu0 0.0
        %539 = vmatpush.msra.mxu0 0.0
        %540 = vmatpush.msra.mxu0 0.0
        %541 = vmatpush.msra.mxu0 0.0
        %542 = vmatpush.msra.mxu0 0.0
        %543 = vmatpush.msra.mxu0 0.0
        %544 = vmatpush.msra.mxu0 0.0
        %545 = vmatpush.msra.mxu0 0.0
        %546 = vmatpush.msra.mxu0 0.0
        %547 = vmatpush.msra.mxu0 0.0
        %548 = vmatpush.msra.mxu0 %v528
        %549 = vmatmul.f32.gmra.mxu0 %v525
        %v550 = vpop.f32.mrf.mxu0
        %v551 = vadd.f32 0.0, %v550
        %552 = vdwg.mxu0
        %553 = vmatpush.msra.mxu0 0.0
        %554 = vmatpush.msra.mxu0 0.0
        %555 = vmatpush.msra.mxu0 0.0
        %556 = vmatpush.msra.mxu0 0.0
        %557 = vmatpush.msra.mxu0 0.0
        %558 = vmatpush.msra.mxu0 0.0
        %559 = vmatpush.msra.mxu0 0.0
        %560 = vmatpush.msra.mxu0 0.0
        %561 = vmatpush.msra.mxu0 0.0
        %562 = vmatpush.msra.mxu0 0.0
        %563 = vmatpush.msra.mxu0 0.0
        %564 = vmatpush.msra.mxu0 0.0
        %565 = vmatpush.msra.mxu0 0.0
        %566 = vmatpush.msra.mxu0 0.0
        %567 = vmatpush.msra.mxu0 0.0
        %568 = vmatpush.msra.mxu0 %v531
        %569 = vmatmul.f32.gmra.mxu0 %v525
        %v570 = vpop.f32.mrf.mxu0
        %v571 = vadd.f32 0.0, %v570
        %572 = vdwg.mxu0
        %v573 = vadd.f32 %v501, %v551
        %v574 = vadd.f32 %v502, %v571
        %s575 = scalar_lea.vmem %s1, 32
        %v576 = vld [vmem:[%s575] sm:$0xff]
        %577 = vst [vmem:[#allocation1] ss:$2 sm:$0xff] %v279
        %v578 = vld.sshfl [vmem:[#allocation1] sm:$0xff pattern:$0x75316420]
        %v579 = vld.sshfl [vmem:[#allocation1 + $0x8] sm:$0xff pattern:$0x75316420]
        %v581 = vsel %vm330, %v576, 0
        %v583 = vsel %vm334, %v578, 0
        %v585 = vsel %vm334, %v579, 0
        %587 = vmatpush.msra.mxu0 0.0
        %588 = vmatpush.msra.mxu0 0.0
        %589 = vmatpush.msra.mxu0 0.0
        %590 = vmatpush.msra.mxu0 0.0
        %591 = vmatpush.msra.mxu0 0.0
        %592 = vmatpush.msra.mxu0 0.0
        %593 = vmatpush.msra.mxu0 0.0
        %594 = vmatpush.msra.mxu0 0.0
        %595 = vmatpush.msra.mxu0 0.0
        %596 = vmatpush.msra.mxu0 0.0
        %597 = vmatpush.msra.mxu0 0.0
        %598 = vmatpush.msra.mxu0 0.0
        %599 = vmatpush.msra.mxu0 0.0
        %600 = vmatpush.msra.mxu0 0.0
        %601 = vmatpush.msra.mxu0 0.0
        %602 = vmatpush.msra.mxu0 %v583
        %603 = vmatmul.f32.gmra.mxu0 %v581
        %v604 = vpop.f32.mrf.mxu0
        %v605 = vadd.f32 0.0, %v604
        %606 = vdwg.mxu0
        %607 = vmatpush.msra.mxu0 0.0
        %608 = vmatpush.msra.mxu0 0.0
        %609 = vmatpush.msra.mxu0 0.0
        %610 = vmatpush.msra.mxu0 0.0
        %611 = vmatpush.msra.mxu0 0.0
        %612 = vmatpush.msra.mxu0 0.0
        %613 = vmatpush.msra.mxu0 0.0
        %614 = vmatpush.msra.mxu0 0.0
        %615 = vmatpush.msra.mxu0 0.0
        %616 = vmatpush.msra.mxu0 0.0
        %617 = vmatpush.msra.mxu0 0.0
        %618 = vmatpush.msra.mxu0 0.0
        %619 = vmatpush.msra.mxu0 0.0
        %620 = vmatpush.msra.mxu0 0.0
        %621 = vmatpush.msra.mxu0 0.0
        %622 = vmatpush.msra.mxu0 %v585
        %623 = vmatmul.f32.gmra.mxu0 %v581
        %v624 = vpop.f32.mrf.mxu0
        %v625 = vadd.f32 0.0, %v624
        %626 = vdwg.mxu0
        %v627 = vadd.f32 %v573, %v605
        %v628 = vadd.f32 %v574, %v625
        %629 = vst [vmem:[#allocation1] ss:$2 sm:$0xff] %v279
        %v630 = vld.sshfl [vmem:[#allocation1] sm:$0xff pattern:$0x75316420]
        %v631 = vld.sshfl [vmem:[#allocation1 + $0x8] sm:$0xff pattern:$0x75316420]
        %634 = vrot.lane.b32.xlu0 %v630, 127
        %v635 = vpop.permute.xlu0 %634
        %636 = vrot.lane.b32.xlu0 %v631, 127
        %v637 = vpop.permute.xlu0 %636
        %vm638 = vcmp.lt.s32.totalorder %v296, 127
        %v639 = vsel %vm638, %v635, %v637
        %v640 = vsel %vm638, %v637, %v635
        %v641 = vsel %vm284, 1, 0
        %v642 = vperm.slane %v641, 0
        %v643 = vperm.slane %v641, 1
        %vm644 = vcmp.eq.s32.totalorder %v642, 1
        %vm645 = vcmp.eq.s32.totalorder %v643, 1
        %v646 = vsel %vm644, %v639, 0.0
        %v647 = vsel %vm645, %v640, 0.0
        %s648 = scalar_lea.vmem %s1, 40
        %v649 = vld [vmem:[%s648] sm:$0xff]
        %v651 = vsel %vm330, %v649, 0
        %v654 = vsel %vm334, %v646, 0
        %v657 = vsel %vm334, %v647, 0
        %659 = vmatpush.msra.mxu0 0.0
        %660 = vmatpush.msra.mxu0 0.0
        %661 = vmatpush.msra.mxu0 0.0
        %662 = vmatpush.msra.mxu0 0.0
        %663 = vmatpush.msra.mxu0 0.0
        %664 = vmatpush.msra.mxu0 0.0
        %665 = vmatpush.msra.mxu0 0.0
        %666 = vmatpush.msra.mxu0 0.0
        %667 = vmatpush.msra.mxu0 0.0
        %668 = vmatpush.msra.mxu0 0.0
        %669 = vmatpush.msra.mxu0 0.0
        %670 = vmatpush.msra.mxu0 0.0
        %671 = vmatpush.msra.mxu0 0.0
        %672 = vmatpush.msra.mxu0 0.0
        %673 = vmatpush.msra.mxu0 0.0
        %674 = vmatpush.msra.mxu0 %v654
        %675 = vmatmul.f32.gmra.mxu0 %v651
        %v676 = vpop.f32.mrf.mxu0
        %v677 = vadd.f32 0.0, %v676
        %678 = vdwg.mxu0
        %679 = vmatpush.msra.mxu0 0.0
        %680 = vmatpush.msra.mxu0 0.0
        %681 = vmatpush.msra.mxu0 0.0
        %682 = vmatpush.msra.mxu0 0.0
        %683 = vmatpush.msra.mxu0 0.0
        %684 = vmatpush.msra.mxu0 0.0
        %685 = vmatpush.msra.mxu0 0.0
        %686 = vmatpush.msra.mxu0 0.0
        %687 = vmatpush.msra.mxu0 0.0
        %688 = vmatpush.msra.mxu0 0.0
        %689 = vmatpush.msra.mxu0 0.0
        %690 = vmatpush.msra.mxu0 0.0
        %691 = vmatpush.msra.mxu0 0.0
        %692 = vmatpush.msra.mxu0 0.0
        %693 = vmatpush.msra.mxu0 0.0
        %694 = vmatpush.msra.mxu0 %v657
        %695 = vmatmul.f32.gmra.mxu0 %v651
        %v696 = vpop.f32.mrf.mxu0
        %v697 = vadd.f32 0.0, %v696
        %698 = vdwg.mxu0
        %v699 = vadd.f32 %v627, %v677
        %v700 = vadd.f32 %v628, %v697
        %701 = vst [vmem:[#allocation1] ss:$2 sm:$0xff] %v279
        %v702 = vld.sshfl [vmem:[#allocation1] sm:$0xff pattern:$0x75316420]
        %v703 = vld.sshfl [vmem:[#allocation1 + $0x8] sm:$0xff pattern:$0x75316420]
        %706 = vrot.lane.b32.xlu0 %v702, 113
        %v707 = vpop.permute.xlu0 %706
        %708 = vrot.lane.b32.xlu0 %v703, 113
        %v709 = vpop.permute.xlu0 %708
        %vm710 = vcmp.lt.s32.totalorder %v296, 113
        %v711 = vsel %vm710, %v707, %v709
        %v712 = vsel %vm710, %v709, %v707
        %vm713 = vmand %vm282, %vm283
        %v714 = vsel %vm713, 1, 0
        %v715 = vperm.slane %v714, 0
        %v716 = vperm.slane %v714, 1
        %vm717 = vcmp.eq.s32.totalorder %v715, 1
        %vm718 = vcmp.eq.s32.totalorder %v716, 1
        %v719 = vsel %vm717, %v711, 0.0
        %v720 = vsel %vm718, %v712, 0.0
        %s721 = scalar_lea.vmem %s1, 48
        %v722 = vld [vmem:[%s721] sm:$0xff]
        %v724 = vsel %vm330, %v722, 0
        %v727 = vsel %vm334, %v719, 0
        %v730 = vsel %vm334, %v720, 0
        %732 = vmatpush.msra.mxu0 0.0
        %733 = vmatpush.msra.mxu0 0.0
        %734 = vmatpush.msra.mxu0 0.0
        %735 = vmatpush.msra.mxu0 0.0
        %736 = vmatpush.msra.mxu0 0.0
        %737 = vmatpush.msra.mxu0 0.0
        %738 = vmatpush.msra.mxu0 0.0
        %739 = vmatpush.msra.mxu0 0.0
        %740 = vmatpush.msra.mxu0 0.0
        %741 = vmatpush.msra.mxu0 0.0
        %742 = vmatpush.msra.mxu0 0.0
        %743 = vmatpush.msra.mxu0 0.0
        %744 = vmatpush.msra.mxu0 0.0
        %745 = vmatpush.msra.mxu0 0.0
        %746 = vmatpush.msra.mxu0 0.0
        %747 = vmatpush.msra.mxu0 %v727
        %748 = vmatmul.f32.gmra.mxu0 %v724
        %v749 = vpop.f32.mrf.mxu0
        %v750 = vadd.f32 0.0, %v749
        %751 = vdwg.mxu0
        %752 = vmatpush.msra.mxu0 0.0
        %753 = vmatpush.msra.mxu0 0.0
        %754 = vmatpush.msra.mxu0 0.0
        %755 = vmatpush.msra.mxu0 0.0
        %756 = vmatpush.msra.mxu0 0.0
        %757 = vmatpush.msra.mxu0 0.0
        %758 = vmatpush.msra.mxu0 0.0
        %759 = vmatpush.msra.mxu0 0.0
        %760 = vmatpush.msra.mxu0 0.0
        %761 = vmatpush.msra.mxu0 0.0
        %762 = vmatpush.msra.mxu0 0.0
        %763 = vmatpush.msra.mxu0 0.0
        %764 = vmatpush.msra.mxu0 0.0
        %765 = vmatpush.msra.mxu0 0.0
        %766 = vmatpush.msra.mxu0 0.0
        %767 = vmatpush.msra.mxu0 %v730
        %768 = vmatmul.f32.gmra.mxu0 %v724
        %v769 = vpop.f32.mrf.mxu0
        %v770 = vadd.f32 0.0, %v769
        %771 = vdwg.mxu0
        %v772 = vadd.f32 %v699, %v750
        %v773 = vadd.f32 %v700, %v770
        %774 = vst [vmem:[#allocation1] ss:$2 sm:$0xff] %v279
        %v775 = vld.sshfl [vmem:[#allocation1] sm:$0xff pattern:$0x75316420]
        %v776 = vld.sshfl [vmem:[#allocation1 + $0x8] sm:$0xff pattern:$0x75316420]
        %779 = vrot.lane.b32.xlu0 %v775, 112
        %v780 = vpop.permute.xlu0 %779
        %781 = vrot.lane.b32.xlu0 %v776, 112
        %v782 = vpop.permute.xlu0 %781
        %vm783 = vcmp.lt.s32.totalorder %v296, 112
        %v784 = vsel %vm783, %v780, %v782
        %v785 = vsel %vm783, %v782, %v780
        %v786 = vsel %vm282, 1, 0
        %v787 = vperm.slane %v786, 0
        %v788 = vperm.slane %v786, 1
        %vm789 = vcmp.eq.s32.totalorder %v787, 1
        %vm790 = vcmp.eq.s32.totalorder %v788, 1
        %v791 = vsel %vm789, %v784, 0.0
        %v792 = vsel %vm790, %v785, 0.0
        %s793 = scalar_lea.vmem %s1, 56
        %v794 = vld [vmem:[%s793] sm:$0xff]
        %v796 = vsel %vm330, %v794, 0
        %v799 = vsel %vm334, %v791, 0
        %v802 = vsel %vm334, %v792, 0
        %804 = vmatpush.msra.mxu0 0.0
        %805 = vmatpush.msra.mxu0 0.0
        %806 = vmatpush.msra.mxu0 0.0
        %807 = vmatpush.msra.mxu0 0.0
        %808 = vmatpush.msra.mxu0 0.0
        %809 = vmatpush.msra.mxu0 0.0
        %810 = vmatpush.msra.mxu0 0.0
        %811 = vmatpush.msra.mxu0 0.0
        %812 = vmatpush.msra.mxu0 0.0
        %813 = vmatpush.msra.mxu0 0.0
        %814 = vmatpush.msra.mxu0 0.0
        %815 = vmatpush.msra.mxu0 0.0
        %816 = vmatpush.msra.mxu0 0.0
        %817 = vmatpush.msra.mxu0 0.0
        %818 = vmatpush.msra.mxu0 0.0
        %819 = vmatpush.msra.mxu0 %v799
        %820 = vmatmul.f32.gmra.mxu0 %v796
        %v821 = vpop.f32.mrf.mxu0
        %v822 = vadd.f32 0.0, %v821
        %823 = vdwg.mxu0
        %824 = vmatpush.msra.mxu0 0.0
        %825 = vmatpush.msra.mxu0 0.0
        %826 = vmatpush.msra.mxu0 0.0
        %827 = vmatpush.msra.mxu0 0.0
        %828 = vmatpush.msra.mxu0 0.0
        %829 = vmatpush.msra.mxu0 0.0
        %830 = vmatpush.msra.mxu0 0.0
        %831 = vmatpush.msra.mxu0 0.0
        %832 = vmatpush.msra.mxu0 0.0
        %833 = vmatpush.msra.mxu0 0.0
        %834 = vmatpush.msra.mxu0 0.0
        %835 = vmatpush.msra.mxu0 0.0
        %836 = vmatpush.msra.mxu0 0.0
        %837 = vmatpush.msra.mxu0 0.0
        %838 = vmatpush.msra.mxu0 0.0
        %839 = vmatpush.msra.mxu0 %v802
        %840 = vmatmul.f32.gmra.mxu0 %v796
        %v841 = vpop.f32.mrf.mxu0
        %v842 = vadd.f32 0.0, %v841
        %843 = vdwg.mxu0
        %v844 = vadd.f32 %v772, %v822
        %v845 = vadd.f32 %v773, %v842
        %846 = vst [vmem:[#allocation1] ss:$2 sm:$0xff] %v279
        %v847 = vld.sshfl [vmem:[#allocation1] sm:$0xff pattern:$0x75316420]
        %v848 = vld.sshfl [vmem:[#allocation1 + $0x8] sm:$0xff pattern:$0x75316420]
        %851 = vrot.lane.b32.xlu0 %v847, 111
        %v852 = vpop.permute.xlu0 %851
        %853 = vrot.lane.b32.xlu0 %v848, 111
        %v854 = vpop.permute.xlu0 %853
        %vm855 = vcmp.lt.s32.totalorder %v296, 111
        %v856 = vsel %vm855, %v852, %v854
        %v857 = vsel %vm855, %v854, %v852
        %vm858 = vmand %vm282, %vm284
        %v859 = vsel %vm858, 1, 0
        %v860 = vperm.slane %v859, 0
        %v861 = vperm.slane %v859, 1
        %vm862 = vcmp.eq.s32.totalorder %v860, 1
        %vm863 = vcmp.eq.s32.totalorder %v861, 1
        %v864 = vsel %vm862, %v856, 0.0
        %v865 = vsel %vm863, %v857, 0.0
        %s866 = scalar_lea.vmem %s1, 64
        %v867 = vld [vmem:[%s866] sm:$0xff]
        %v869 = vsel %vm330, %v867, 0
        %v872 = vsel %vm334, %v864, 0
        %v875 = vsel %vm334, %v865, 0
        %877 = vmatpush.msra.mxu0 0.0
        %878 = vmatpush.msra.mxu0 0.0
        %879 = vmatpush.msra.mxu0 0.0
        %880 = vmatpush.msra.mxu0 0.0
        %881 = vmatpush.msra.mxu0 0.0
        %882 = vmatpush.msra.mxu0 0.0
        %883 = vmatpush.msra.mxu0 0.0
        %884 = vmatpush.msra.mxu0 0.0
        %885 = vmatpush.msra.mxu0 0.0
        %886 = vmatpush.msra.mxu0 0.0
        %887 = vmatpush.msra.mxu0 0.0
        %888 = vmatpush.msra.mxu0 0.0
        %889 = vmatpush.msra.mxu0 0.0
        %890 = vmatpush.msra.mxu0 0.0
        %891 = vmatpush.msra.mxu0 0.0
        %892 = vmatpush.msra.mxu0 %v872
        %893 = vmatmul.f32.gmra.mxu0 %v869
        %v894 = vpop.f32.mrf.mxu0
        %v895 = vadd.f32 0.0, %v894
        %896 = vdwg.mxu0
        %897 = vmatpush.msra.mxu0 0.0
        %898 = vmatpush.msra.mxu0 0.0
        %899 = vmatpush.msra.mxu0 0.0
        %900 = vmatpush.msra.mxu0 0.0
        %901 = vmatpush.msra.mxu0 0.0
        %902 = vmatpush.msra.mxu0 0.0
        %903 = vmatpush.msra.mxu0 0.0
        %904 = vmatpush.msra.mxu0 0.0
        %905 = vmatpush.msra.mxu0 0.0
        %906 = vmatpush.msra.mxu0 0.0
        %907 = vmatpush.msra.mxu0 0.0
        %908 = vmatpush.msra.mxu0 0.0
        %909 = vmatpush.msra.mxu0 0.0
        %910 = vmatpush.msra.mxu0 0.0
        %911 = vmatpush.msra.mxu0 0.0
        %912 = vmatpush.msra.mxu0 %v875
        %913 = vmatmul.f32.gmra.mxu0 %v869
        %v914 = vpop.f32.mrf.mxu0
        %v915 = vadd.f32 0.0, %v914
        %916 = vdwg.mxu0
        %v917 = vadd.f32 %v844, %v895
        %v918 = vadd.f32 %v845, %v915
        %920 = vset.pattern.permute.xlu0 0
        %921 = vperm.xlu0 %920, %v280
        %v922 = vpop.permute.xlu0 %921
        %v924 = vadd.f32 %v917, %v922
        %v925 = vadd.f32 %v918, %v922
        %v926 = vmax.f32 %v924, 0.0
        %v927 = vmax.f32 %v925, 0.0
        %v928 = vld [vmem:[%s4] sm:$0xff]
        %929 = vrot.lane.b32.xlu0 %v926, 17
        %v930 = vpop.permute.xlu0 %929
        %931 = vrot.lane.b32.xlu0 %v927, 17
        %v932 = vpop.permute.xlu0 %931
        %v933 = vsel %vm297, %v930, %v932
        %v934 = vsel %vm297, %v932, %v930
        %v935 = vsel %vm304, %v934, 0.0
        %v936 = vsel %vm305, %v933, 0.0
        %v937 = vld [vmem:[%s3] sm:$0xff]
        %938 = vrot.lane.b32.xlu0 %v926, 16
        %v939 = vpop.permute.xlu0 %938
        %940 = vrot.lane.b32.xlu0 %v927, 16
        %v941 = vpop.permute.xlu0 %940
        %v942 = vsel %vm318, %v939, %v941
        %v943 = vsel %vm318, %v941, %v939
        %v944 = vsel %vm324, %v943, 0.0
        %v945 = vsel %vm325, %v942, 0.0
        %s946 = scalar_lea.vmem %s3, 8
        %v947 = vld [vmem:[%s946] sm:$0xff]
        %vm948 = vcmask 64512
        %v950 = vsel %vm948, %v947, 0
        %952 = vmatpush.msra.mxu0 0.0
        %953 = vmatpush.msra.mxu0 0.0
        %954 = vmatpush.msra.mxu0 0.0
        %955 = vmatpush.msra.mxu0 0.0
        %956 = vmatpush.msra.mxu0 0.0
        %957 = vmatpush.msra.mxu0 0.0
        %958 = vmatpush.msra.mxu0 0.0
        %959 = vmatpush.msra.mxu0 0.0
        %960 = vmatpush.msra.mxu0 0.0
        %961 = vmatpush.msra.mxu0 0.0
        %962 = vmatpush.msra.mxu0 0.0
        %963 = vmatpush.msra.mxu0 0.0
        %964 = vmatpush.msra.mxu0 0.0
        %965 = vmatpush.msra.mxu0 0.0
        %966 = vmatpush.msra.mxu0 0.0
        %967 = vmatpush.msra.mxu0 %v944
        %968 = vmatmul.f32.gmra.mxu0 %v950
        %v969 = vpop.f32.mrf.mxu0
        %v970 = vadd.f32 0.0, %v969
        %971 = vdwg.mxu0
        %972 = vmatpush.msra.mxu0 0.0
        %973 = vmatpush.msra.mxu0 0.0
        %974 = vmatpush.msra.mxu0 0.0
        %975 = vmatpush.msra.mxu0 0.0
        %976 = vmatpush.msra.mxu0 0.0
        %977 = vmatpush.msra.mxu0 0.0
        %978 = vmatpush.msra.mxu0 0.0
        %979 = vmatpush.msra.mxu0 0.0
        %980 = vmatpush.msra.mxu0 0.0
        %981 = vmatpush.msra.mxu0 0.0
        %982 = vmatpush.msra.mxu0 0.0
        %983 = vmatpush.msra.mxu0 0.0
        %984 = vmatpush.msra.mxu0 0.0
        %985 = vmatpush.msra.mxu0 0.0
        %986 = vmatpush.msra.mxu0 0.0
        %987 = vmatpush.msra.mxu0 %v945
        %988 = vmatmul.f32.gmra.mxu0 %v950
        %v989 = vpop.f32.mrf.mxu0
        %v990 = vadd.f32 0.0, %v989
        %991 = vdwg.mxu0
        %v993 = vsel %vm948, %v937, 0
        %995 = vmatpush.msra.mxu0 0.0
        %996 = vmatpush.msra.mxu0 0.0
        %997 = vmatpush.msra.mxu0 0.0
        %998 = vmatpush.msra.mxu0 0.0
        %999 = vmatpush.msra.mxu0 0.0
        %1000 = vmatpush.msra.mxu0 0.0
        %1001 = vmatpush.msra.mxu0 0.0
        %1002 = vmatpush.msra.mxu0 0.0
        %1003 = vmatpush.msra.mxu0 0.0
        %1004 = vmatpush.msra.mxu0 0.0
        %1005 = vmatpush.msra.mxu0 0.0
        %1006 = vmatpush.msra.mxu0 0.0
        %1007 = vmatpush.msra.mxu0 0.0
        %1008 = vmatpush.msra.mxu0 0.0
        %1009 = vmatpush.msra.mxu0 0.0
        %1010 = vmatpush.msra.mxu0 %v935
        %1011 = vmatmul.f32.gmra.mxu0 %v993
        %v1012 = vpop.f32.mrf.mxu0
        %v1013 = vadd.f32 %v970, %v1012
        %1014 = vdwg.mxu0
        %1015 = vmatpush.msra.mxu0 0.0
        %1016 = vmatpush.msra.mxu0 0.0
        %1017 = vmatpush.msra.mxu0 0.0
        %1018 = vmatpush.msra.mxu0 0.0
        %1019 = vmatpush.msra.mxu0 0.0
        %1020 = vmatpush.msra.mxu0 0.0
        %1021 = vmatpush.msra.mxu0 0.0
        %1022 = vmatpush.msra.mxu0 0.0
        %1023 = vmatpush.msra.mxu0 0.0
        %1024 = vmatpush.msra.mxu0 0.0
        %1025 = vmatpush.msra.mxu0 0.0
        %1026 = vmatpush.msra.mxu0 0.0
        %1027 = vmatpush.msra.mxu0 0.0
        %1028 = vmatpush.msra.mxu0 0.0
        %1029 = vmatpush.msra.mxu0 0.0
        %1030 = vmatpush.msra.mxu0 %v936
        %1031 = vmatmul.f32.gmra.mxu0 %v993
        %v1032 = vpop.f32.mrf.mxu0
        %v1033 = vadd.f32 %v990, %v1032
        %1034 = vdwg.mxu0
        %1035 = vrot.lane.b32.xlu0 %v926, 15
        %v1036 = vpop.permute.xlu0 %1035
        %1037 = vrot.lane.b32.xlu0 %v927, 15
        %v1038 = vpop.permute.xlu0 %1037
        %v1039 = vsel %vm439, %v1036, %v1038
        %v1040 = vsel %vm439, %v1038, %v1036
        %v1041 = vsel %vm446, %v1040, 0.0
        %v1042 = vsel %vm447, %v1039, 0.0
        %s1043 = scalar_lea.vmem %s3, 16
        %v1044 = vld [vmem:[%s1043] sm:$0xff]
        %v1046 = vsel %vm948, %v1044, 0
        %1048 = vmatpush.msra.mxu0 0.0
        %1049 = vmatpush.msra.mxu0 0.0
        %1050 = vmatpush.msra.mxu0 0.0
        %1051 = vmatpush.msra.mxu0 0.0
        %1052 = vmatpush.msra.mxu0 0.0
        %1053 = vmatpush.msra.mxu0 0.0
        %1054 = vmatpush.msra.mxu0 0.0
        %1055 = vmatpush.msra.mxu0 0.0
        %1056 = vmatpush.msra.mxu0 0.0
        %1057 = vmatpush.msra.mxu0 0.0
        %1058 = vmatpush.msra.mxu0 0.0
        %1059 = vmatpush.msra.mxu0 0.0
        %1060 = vmatpush.msra.mxu0 0.0
        %1061 = vmatpush.msra.mxu0 0.0
        %1062 = vmatpush.msra.mxu0 0.0
        %1063 = vmatpush.msra.mxu0 %v1041
        %1064 = vmatmul.f32.gmra.mxu0 %v1046
        %v1065 = vpop.f32.mrf.mxu0
        %v1066 = vadd.f32 0.0, %v1065
        %1067 = vdwg.mxu0
        %1068 = vmatpush.msra.mxu0 0.0
        %1069 = vmatpush.msra.mxu0 0.0
        %1070 = vmatpush.msra.mxu0 0.0
        %1071 = vmatpush.msra.mxu0 0.0
        %1072 = vmatpush.msra.mxu0 0.0
        %1073 = vmatpush.msra.mxu0 0.0
        %1074 = vmatpush.msra.mxu0 0.0
        %1075 = vmatpush.msra.mxu0 0.0
        %1076 = vmatpush.msra.mxu0 0.0
        %1077 = vmatpush.msra.mxu0 0.0
        %1078 = vmatpush.msra.mxu0 0.0
        %1079 = vmatpush.msra.mxu0 0.0
        %1080 = vmatpush.msra.mxu0 0.0
        %1081 = vmatpush.msra.mxu0 0.0
        %1082 = vmatpush.msra.mxu0 0.0
        %1083 = vmatpush.msra.mxu0 %v1042
        %1084 = vmatmul.f32.gmra.mxu0 %v1046
        %v1085 = vpop.f32.mrf.mxu0
        %v1086 = vadd.f32 0.0, %v1085
        %1087 = vdwg.mxu0
        %v1088 = vadd.f32 %v1013, %v1066
        %v1089 = vadd.f32 %v1033, %v1086
        %1090 = vrot.lane.b32.xlu0 %v926, 1
        %v1091 = vpop.permute.xlu0 %1090
        %1092 = vrot.lane.b32.xlu0 %v927, 1
        %v1093 = vpop.permute.xlu0 %1092
        %v1094 = vsel %vm512, %v1091, %v1093
        %v1095 = vsel %vm512, %v1093, %v1091
        %v1096 = vsel %vm518, %v1095, 0.0
        %v1097 = vsel %vm519, %v1094, 0.0
        %s1098 = scalar_lea.vmem %s3, 24
        %v1099 = vld [vmem:[%s1098] sm:$0xff]
        %v1101 = vsel %vm948, %v1099, 0
        %1103 = vmatpush.msra.mxu0 0.0
        %1104 = vmatpush.msra.mxu0 0.0
        %1105 = vmatpush.msra.mxu0 0.0
        %1106 = vmatpush.msra.mxu0 0.0
        %1107 = vmatpush.msra.mxu0 0.0
        %1108 = vmatpush.msra.mxu0 0.0
        %1109 = vmatpush.msra.mxu0 0.0
        %1110 = vmatpush.msra.mxu0 0.0
        %1111 = vmatpush.msra.mxu0 0.0
        %1112 = vmatpush.msra.mxu0 0.0
        %1113 = vmatpush.msra.mxu0 0.0
        %1114 = vmatpush.msra.mxu0 0.0
        %1115 = vmatpush.msra.mxu0 0.0
        %1116 = vmatpush.msra.mxu0 0.0
        %1117 = vmatpush.msra.mxu0 0.0
        %1118 = vmatpush.msra.mxu0 %v1096
        %1119 = vmatmul.f32.gmra.mxu0 %v1101
        %v1120 = vpop.f32.mrf.mxu0
        %v1121 = vadd.f32 0.0, %v1120
        %1122 = vdwg.mxu0
        %1123 = vmatpush.msra.mxu0 0.0
        %1124 = vmatpush.msra.mxu0 0.0
        %1125 = vmatpush.msra.mxu0 0.0
        %1126 = vmatpush.msra.mxu0 0.0
        %1127 = vmatpush.msra.mxu0 0.0
        %1128 = vmatpush.msra.mxu0 0.0
        %1129 = vmatpush.msra.mxu0 0.0
        %1130 = vmatpush.msra.mxu0 0.0
        %1131 = vmatpush.msra.mxu0 0.0
        %1132 = vmatpush.msra.mxu0 0.0
        %1133 = vmatpush.msra.mxu0 0.0
        %1134 = vmatpush.msra.mxu0 0.0
        %1135 = vmatpush.msra.mxu0 0.0
        %1136 = vmatpush.msra.mxu0 0.0
        %1137 = vmatpush.msra.mxu0 0.0
        %1138 = vmatpush.msra.mxu0 %v1097
        %1139 = vmatmul.f32.gmra.mxu0 %v1101
        %v1140 = vpop.f32.mrf.mxu0
        %v1141 = vadd.f32 0.0, %v1140
        %1142 = vdwg.mxu0
        %v1143 = vadd.f32 %v1088, %v1121
        %v1144 = vadd.f32 %v1089, %v1141
        %s1145 = scalar_lea.vmem %s3, 32
        %v1146 = vld [vmem:[%s1145] sm:$0xff]
        %v1148 = vsel %vm948, %v1146, 0
        %1150 = vmatpush.msra.mxu0 0.0
        %1151 = vmatpush.msra.mxu0 0.0
        %1152 = vmatpush.msra.mxu0 0.0
        %1153 = vmatpush.msra.mxu0 0.0
        %1154 = vmatpush.msra.mxu0 0.0
        %1155 = vmatpush.msra.mxu0 0.0
        %1156 = vmatpush.msra.mxu0 0.0
        %1157 = vmatpush.msra.mxu0 0.0
        %1158 = vmatpush.msra.mxu0 0.0
        %1159 = vmatpush.msra.mxu0 0.0
        %1160 = vmatpush.msra.mxu0 0.0
        %1161 = vmatpush.msra.mxu0 0.0
        %1162 = vmatpush.msra.mxu0 0.0
        %1163 = vmatpush.msra.mxu0 0.0
        %1164 = vmatpush.msra.mxu0 0.0
        %1165 = vmatpush.msra.mxu0 %v926
        %1166 = vmatmul.f32.gmra.mxu0 %v1148
        %v1167 = vpop.f32.mrf.mxu0
        %v1168 = vadd.f32 0.0, %v1167
        %1169 = vdwg.mxu0
        %1170 = vmatpush.msra.mxu0 0.0
        %1171 = vmatpush.msra.mxu0 0.0
        %1172 = vmatpush.msra.mxu0 0.0
        %1173 = vmatpush.msra.mxu0 0.0
        %1174 = vmatpush.msra.mxu0 0.0
        %1175 = vmatpush.msra.mxu0 0.0
        %1176 = vmatpush.msra.mxu0 0.0
        %1177 = vmatpush.msra.mxu0 0.0
        %1178 = vmatpush.msra.mxu0 0.0
        %1179 = vmatpush.msra.mxu0 0.0
        %1180 = vmatpush.msra.mxu0 0.0
        %1181 = vmatpush.msra.mxu0 0.0
        %1182 = vmatpush.msra.mxu0 0.0
        %1183 = vmatpush.msra.mxu0 0.0
        %1184 = vmatpush.msra.mxu0 0.0
        %1185 = vmatpush.msra.mxu0 %v927
        %1186 = vmatmul.f32.gmra.mxu0 %v1148
        %v1187 = vpop.f32.mrf.mxu0
        %v1188 = vadd.f32 0.0, %v1187
        %1189 = vdwg.mxu0
        %v1190 = vadd.f32 %v1143, %v1168
        %v1191 = vadd.f32 %v1144, %v1188
        %1192 = vrot.lane.b32.xlu0 %v926, 127
        %v1193 = vpop.permute.xlu0 %1192
        %1194 = vrot.lane.b32.xlu0 %v927, 127
        %v1195 = vpop.permute.xlu0 %1194
        %v1196 = vsel %vm638, %v1193, %v1195
        %v1197 = vsel %vm638, %v1195, %v1193
        %v1198 = vsel %vm644, %v1196, 0.0
        %v1199 = vsel %vm645, %v1197, 0.0
        %s1200 = scalar_lea.vmem %s3, 40
        %v1201 = vld [vmem:[%s1200] sm:$0xff]
        %v1203 = vsel %vm948, %v1201, 0
        %1205 = vmatpush.msra.mxu0 0.0
        %1206 = vmatpush.msra.mxu0 0.0
        %1207 = vmatpush.msra.mxu0 0.0
        %1208 = vmatpush.msra.mxu0 0.0
        %1209 = vmatpush.msra.mxu0 0.0
        %1210 = vmatpush.msra.mxu0 0.0
        %1211 = vmatpush.msra.mxu0 0.0
        %1212 = vmatpush.msra.mxu0 0.0
        %1213 = vmatpush.msra.mxu0 0.0
        %1214 = vmatpush.msra.mxu0 0.0
        %1215 = vmatpush.msra.mxu0 0.0
        %1216 = vmatpush.msra.mxu0 0.0
        %1217 = vmatpush.msra.mxu0 0.0
        %1218 = vmatpush.msra.mxu0 0.0
        %1219 = vmatpush.msra.mxu0 0.0
        %1220 = vmatpush.msra.mxu0 %v1198
        %1221 = vmatmul.f32.gmra.mxu0 %v1203
        %v1222 = vpop.f32.mrf.mxu0
        %v1223 = vadd.f32 0.0, %v1222
        %1224 = vdwg.mxu0
        %1225 = vmatpush.msra.mxu0 0.0
        %1226 = vmatpush.msra.mxu0 0.0
        %1227 = vmatpush.msra.mxu0 0.0
        %1228 = vmatpush.msra.mxu0 0.0
        %1229 = vmatpush.msra.mxu0 0.0
        %1230 = vmatpush.msra.mxu0 0.0
        %1231 = vmatpush.msra.mxu0 0.0
        %1232 = vmatpush.msra.mxu0 0.0
        %1233 = vmatpush.msra.mxu0 0.0
        %1234 = vmatpush.msra.mxu0 0.0
        %1235 = vmatpush.msra.mxu0 0.0
        %1236 = vmatpush.msra.mxu0 0.0
        %1237 = vmatpush.msra.mxu0 0.0
        %1238 = vmatpush.msra.mxu0 0.0
        %1239 = vmatpush.msra.mxu0 0.0
        %1240 = vmatpush.msra.mxu0 %v1199
        %1241 = vmatmul.f32.gmra.mxu0 %v1203
        %v1242 = vpop.f32.mrf.mxu0
        %v1243 = vadd.f32 0.0, %v1242
        %1244 = vdwg.mxu0
        %v1245 = vadd.f32 %v1190, %v1223
        %v1246 = vadd.f32 %v1191, %v1243
        %1247 = vrot.lane.b32.xlu0 %v926, 113
        %v1248 = vpop.permute.xlu0 %1247
        %1249 = vrot.lane.b32.xlu0 %v927, 113
        %v1250 = vpop.permute.xlu0 %1249
        %v1251 = vsel %vm710, %v1248, %v1250
        %v1252 = vsel %vm710, %v1250, %v1248
        %v1253 = vsel %vm717, %v1251, 0.0
        %v1254 = vsel %vm718, %v1252, 0.0
        %s1255 = scalar_lea.vmem %s3, 48
        %v1256 = vld [vmem:[%s1255] sm:$0xff]
        %v1258 = vsel %vm948, %v1256, 0
        %1260 = vmatpush.msra.mxu0 0.0
        %1261 = vmatpush.msra.mxu0 0.0
        %1262 = vmatpush.msra.mxu0 0.0
        %1263 = vmatpush.msra.mxu0 0.0
        %1264 = vmatpush.msra.mxu0 0.0
        %1265 = vmatpush.msra.mxu0 0.0
        %1266 = vmatpush.msra.mxu0 0.0
        %1267 = vmatpush.msra.mxu0 0.0
        %1268 = vmatpush.msra.mxu0 0.0
        %1269 = vmatpush.msra.mxu0 0.0
        %1270 = vmatpush.msra.mxu0 0.0
        %1271 = vmatpush.msra.mxu0 0.0
        %1272 = vmatpush.msra.mxu0 0.0
        %1273 = vmatpush.msra.mxu0 0.0
        %1274 = vmatpush.msra.mxu0 0.0
        %1275 = vmatpush.msra.mxu0 %v1253
        %1276 = vmatmul.f32.gmra.mxu0 %v1258
        %v1277 = vpop.f32.mrf.mxu0
        %v1278 = vadd.f32 0.0, %v1277
        %1279 = vdwg.mxu0
        %1280 = vmatpush.msra.mxu0 0.0
        %1281 = vmatpush.msra.mxu0 0.0
        %1282 = vmatpush.msra.mxu0 0.0
        %1283 = vmatpush.msra.mxu0 0.0
        %1284 = vmatpush.msra.mxu0 0.0
        %1285 = vmatpush.msra.mxu0 0.0
        %1286 = vmatpush.msra.mxu0 0.0
        %1287 = vmatpush.msra.mxu0 0.0
        %1288 = vmatpush.msra.mxu0 0.0
        %1289 = vmatpush.msra.mxu0 0.0
        %1290 = vmatpush.msra.mxu0 0.0
        %1291 = vmatpush.msra.mxu0 0.0
        %1292 = vmatpush.msra.mxu0 0.0
        %1293 = vmatpush.msra.mxu0 0.0
        %1294 = vmatpush.msra.mxu0 0.0
        %1295 = vmatpush.msra.mxu0 %v1254
        %1296 = vmatmul.f32.gmra.mxu0 %v1258
        %v1297 = vpop.f32.mrf.mxu0
        %v1298 = vadd.f32 0.0, %v1297
        %1299 = vdwg.mxu0
        %v1300 = vadd.f32 %v1245, %v1278
        %v1301 = vadd.f32 %v1246, %v1298
        %1302 = vrot.lane.b32.xlu0 %v926, 112
        %v1303 = vpop.permute.xlu0 %1302
        %1304 = vrot.lane.b32.xlu0 %v927, 112
        %v1305 = vpop.permute.xlu0 %1304
        %v1306 = vsel %vm783, %v1303, %v1305
        %v1307 = vsel %vm783, %v1305, %v1303
        %v1308 = vsel %vm789, %v1306, 0.0
        %v1309 = vsel %vm790, %v1307, 0.0
        %s1310 = scalar_lea.vmem %s3, 56
        %v1311 = vld [vmem:[%s1310] sm:$0xff]
        %v1313 = vsel %vm948, %v1311, 0
        %1315 = vmatpush.msra.mxu0 0.0
        %1316 = vmatpush.msra.mxu0 0.0
        %1317 = vmatpush.msra.mxu0 0.0
        %1318 = vmatpush.msra.mxu0 0.0
        %1319 = vmatpush.msra.mxu0 0.0
        %1320 = vmatpush.msra.mxu0 0.0
        %1321 = vmatpush.msra.mxu0 0.0
        %1322 = vmatpush.msra.mxu0 0.0
        %1323 = vmatpush.msra.mxu0 0.0
        %1324 = vmatpush.msra.mxu0 0.0
        %1325 = vmatpush.msra.mxu0 0.0
        %1326 = vmatpush.msra.mxu0 0.0
        %1327 = vmatpush.msra.mxu0 0.0
        %1328 = vmatpush.msra.mxu0 0.0
        %1329 = vmatpush.msra.mxu0 0.0
        %1330 = vmatpush.msra.mxu0 %v1308
        %1331 = vmatmul.f32.gmra.mxu0 %v1313
        %v1332 = vpop.f32.mrf.mxu0
        %v1333 = vadd.f32 0.0, %v1332
        %1334 = vdwg.mxu0
        %1335 = vmatpush.msra.mxu0 0.0
        %1336 = vmatpush.msra.mxu0 0.0
        %1337 = vmatpush.msra.mxu0 0.0
        %1338 = vmatpush.msra.mxu0 0.0
        %1339 = vmatpush.msra.mxu0 0.0
        %1340 = vmatpush.msra.mxu0 0.0
        %1341 = vmatpush.msra.mxu0 0.0
        %1342 = vmatpush.msra.mxu0 0.0
        %1343 = vmatpush.msra.mxu0 0.0
        %1344 = vmatpush.msra.mxu0 0.0
        %1345 = vmatpush.msra.mxu0 0.0
        %1346 = vmatpush.msra.mxu0 0.0
        %1347 = vmatpush.msra.mxu0 0.0
        %1348 = vmatpush.msra.mxu0 0.0
        %1349 = vmatpush.msra.mxu0 0.0
        %1350 = vmatpush.msra.mxu0 %v1309
        %1351 = vmatmul.f32.gmra.mxu0 %v1313
        %v1352 = vpop.f32.mrf.mxu0
        %v1353 = vadd.f32 0.0, %v1352
        %1354 = vdwg.mxu0
        %v1355 = vadd.f32 %v1300, %v1333
        %v1356 = vadd.f32 %v1301, %v1353
        %1357 = vrot.lane.b32.xlu0 %v926, 111
        %v1358 = vpop.permute.xlu0 %1357
        %1359 = vrot.lane.b32.xlu0 %v927, 111
        %v1360 = vpop.permute.xlu0 %1359
        %v1361 = vsel %vm855, %v1358, %v1360
        %v1362 = vsel %vm855, %v1360, %v1358
        %v1363 = vsel %vm862, %v1361, 0.0
        %v1364 = vsel %vm863, %v1362, 0.0
        %s1365 = scalar_lea.vmem %s3, 64
        %v1366 = vld [vmem:[%s1365] sm:$0xff]
        %v1368 = vsel %vm948, %v1366, 0
        %1370 = vmatpush.msra.mxu0 0.0
        %1371 = vmatpush.msra.mxu0 0.0
        %1372 = vmatpush.msra.mxu0 0.0
        %1373 = vmatpush.msra.mxu0 0.0
        %1374 = vmatpush.msra.mxu0 0.0
        %1375 = vmatpush.msra.mxu0 0.0
        %1376 = vmatpush.msra.mxu0 0.0
        %1377 = vmatpush.msra.mxu0 0.0
        %1378 = vmatpush.msra.mxu0 0.0
        %1379 = vmatpush.msra.mxu0 0.0
        %1380 = vmatpush.msra.mxu0 0.0
        %1381 = vmatpush.msra.mxu0 0.0
        %1382 = vmatpush.msra.mxu0 0.0
        %1383 = vmatpush.msra.mxu0 0.0
        %1384 = vmatpush.msra.mxu0 0.0
        %1385 = vmatpush.msra.mxu0 %v1363
        %1386 = vmatmul.f32.gmra.mxu0 %v1368
        %v1387 = vpop.f32.mrf.mxu0
        %v1388 = vadd.f32 0.0, %v1387
        %1389 = vdwg.mxu0
        %1390 = vmatpush.msra.mxu0 0.0
        %1391 = vmatpush.msra.mxu0 0.0
        %1392 = vmatpush.msra.mxu0 0.0
        %1393 = vmatpush.msra.mxu0 0.0
        %1394 = vmatpush.msra.mxu0 0.0
        %1395 = vmatpush.msra.mxu0 0.0
        %1396 = vmatpush.msra.mxu0 0.0
        %1397 = vmatpush.msra.mxu0 0.0
        %1398 = vmatpush.msra.mxu0 0.0
        %1399 = vmatpush.msra.mxu0 0.0
        %1400 = vmatpush.msra.mxu0 0.0
        %1401 = vmatpush.msra.mxu0 0.0
        %1402 = vmatpush.msra.mxu0 0.0
        %1403 = vmatpush.msra.mxu0 0.0
        %1404 = vmatpush.msra.mxu0 0.0
        %1405 = vmatpush.msra.mxu0 %v1364
        %1406 = vmatmul.f32.gmra.mxu0 %v1368
        %v1407 = vpop.f32.mrf.mxu0
        %v1408 = vadd.f32 0.0, %v1407
        %1409 = vdwg.mxu0
        %v1410 = vadd.f32 %v1355, %v1388
        %v1411 = vadd.f32 %v1356, %v1408
        %1413 = vset.pattern.permute.xlu0 0
        %1414 = vperm.xlu0 %1413, %v928
        %v1415 = vpop.permute.xlu0 %1414
        %v1417 = vadd.f32 %v1410, %v1415
        %v1418 = vadd.f32 %v1411, %v1415
        %v1419 = vmax.f32 %v1417, 0.0
        %v1420 = vmax.f32 %v1418, 0.0
        %1421 = vst [vmem:[%s271] sm:$0xff] %v1419
        %1422 = vst [vmem:[%s271 + $0x8] sm:$0xff] %v1420
        %s1423 = sand.u32 %s181, 1
        %s1424 = scalar_lea.sflag [#allocation3], %s1423
        %s1425 = sand.u32 %s181, 1
        %s1426 = smul.addr %s1425, 16
        %s1427 = scalar_lea.vmem [#allocation2], %s1426
        // Predicated region
        $region49: #{tpu_custom_call.1} parent=47 // pred_check
          %p1428 = pneg %p191
        $region50: #{tpu_custom_call.1} parent=47 // pred_check_branch
          %1430 = sbr.rel (%p1428) target = $region52
        $region51: #{tpu_custom_call.1} parent=47 // pred_region
          %1432 = vsyncadd %s1424, 0
          %s1433 = smul.addr %s21, 2
          %s1434 = smul.addr %s1433, 8
          %s1435 = scalar_lea.hbm %s7, %s1434
          %s1437 = sshll.u32 %s1427, 4
          %s1438 = int_to_ptr.vmem [resolvable:$true] %s1437
          %s1439 = sshll.u32 %s1435, 4
          %s1440 = int_to_ptr.hbm [resolvable:$true] %s1439
          %1442 = dma.vmem_to_hbm [thread:$0]  %s1438, 256, %s1440, %s1424
        $region52: #{tpu_custom_call.1} parent=47 // pred_fallthru
          _
      $region48: #{tpu_custom_call.1} parent=5 // pred_fallthru
        _
      %p1443 = scmp.le.s32.totalorder 2, %s16
      // Predicated region
      $region53: #{tpu_custom_call.1} parent=5 // pred_check
        %p1444 = pneg %p1443
      $region54: #{tpu_custom_call.1} parent=5 // pred_check_branch
        %1446 = sbr.rel (%p1444) target = $region56
      $region55: #{tpu_custom_call.1} parent=5 // pred_region
        %s1447 = ssub.s32 %s16, 2
        // Predicated region
        $region57: #{tpu_custom_call.1} parent=55 // pred_check
          %p1448 = pneg %p197
        $region58: #{tpu_custom_call.1} parent=55 // pred_check_branch
          %1450 = sbr.rel (%p1448) target = $region60
        $region59: #{tpu_custom_call.1} parent=55 // pred_region
          %s1451 = sand.u32 %s182, 1
          %s1452 = scalar_lea.sflag [#allocation3], %s1451
          %s1453 = sand.u32 %s182, 1
          %s1454 = smul.addr %s1453, 16
          %s1455 = scalar_lea.vmem [#allocation2], %s1454
          %1457 = dma.done %s1452, 256
        $region60: #{tpu_custom_call.1} parent=55 // pred_fallthru
          _
      $region56: #{tpu_custom_call.1} parent=5 // pred_fallthru
        _
    $region6: #{tpu_custom_call.1} parent=1 // loop_footer
      %s20 = sadd.s32 1, %s16
    $region7: #{tpu_custom_call.1} parent=1 // loop_footer_branch
      %15 = sbr.rel target = $region3
    $region8: #{tpu_custom_call.1} parent=1 // loop_exit
      _
    %1458 = vsyncpa [#allocation3], 1
    %s1459 = scalar_lea.sflag [#allocation3], 1
    %1460 = vsyncpa %s1459, 1

</llo_original>
